<compile_context>
chip_gen: v7x
topology: tpu7x:2x2x1
jax: 0.10.0
libtpu: 0.0.40
codegen_flags: <defaults>
</compile_context>

<pallas_src>
import functools

import jax
import jax.numpy as jnp
from jax import lax
from jax.experimental import pallas as pl
from jax.experimental.pallas import tpu as pltpu

# ---------------------------------------------------------------------------
# model dimensions (small, synthetic)
# ---------------------------------------------------------------------------
B = 2          # batch of dialogues
T = 8          # context length (tokens)
V = 64         # vocab size (shared token + schema-description vocabulary)
D = 32         # embedding dim
H = 32         # hidden dim
N_GATE = 3     # gate classes (none / dontcare / active)
MAX_LEN = 4    # decoder steps (static)
LANES = 128    # lane-dense output / slab width

N_IDX = B * T + 8 * B        # 32 ids gathered in-kernel (ctx + 4x(svc,itm))
assert 2 + N_GATE <= LANES and V <= LANES and B <= 8

# --- packed weight-slab row offsets (all multiples of 8 -> tile-aligned) ----
OFF_EMB = 0                        # (V, D)   shared embedding table
OFF_ENC_SEQ = OFF_EMB + V          # (D, H)   encoder per-token projection
OFF_ENC_HID = OFF_ENC_SEQ + D      # (H, H)   encoder pooled->hidden
OFF_SCH = OFF_ENC_HID + H          # (2D, H)  schema loader [svc|itm]
OFF_W1H = OFF_SCH + 2 * D          # (H, 3H)  heads: hidden branch (act|req|gat)
OFF_W1S = OFF_W1H + H              # (3H, 3H) heads: schema branch (block-diag)
OFF_W2 = OFF_W1S + 3 * H           # (3H, 128) heads: output (block-diag, padded)
OFF_DEC_I = OFF_W2 + 3 * H         # (2H, H)  decoder init [hid|sch_val]
OFF_DEC_SS = OFF_DEC_I + 2 * H     # (H, H)   decoder recurrence
OFF_DEC_SV = OFF_DEC_SS + H        # (H, 128) decoder vocab proj (V padded)
OFF_BIAS = OFF_DEC_SV + H          # (8, 128) bias rows (6 used)
W_ROWS = OFF_BIAS + 8              # 552 rows x 128 lanes x f32 = 276 KiB

# bias row indices inside the bias block
BR_ENC_SEQ, BR_ENC_HID, BR_SCH, BR_HEAD1, BR_HEAD2, BR_DEC_I = range(6)


# ---------------------------------------------------------------------------
# One fused Pallas kernel for the full forward pass
# ---------------------------------------------------------------------------
def fused_forward_kernel(idx_ref, w_ref, out_ref, st_ref, *, max_len):
    f32 = jnp.float32

    def bias(row, width):
        return w_ref[OFF_BIAS + row:OFF_BIAS + row + 1, 0:width]     # (1, width)

    # --- embedding gather: ONE one-hot MXU pass for all 32 ids --------------
    idx = idx_ref[...]                                               # (N_IDX,1) i32
    onehot = (idx == lax.broadcasted_iota(jnp.int32, (N_IDX, V), 1)).astype(f32)
    emb_tab = w_ref[OFF_EMB:OFF_EMB + V, 0:D]                        # (V, D)
    emb_all = jnp.dot(onehot, emb_tab, preferred_element_type=f32)   # (N_IDX, D)

    ctx = emb_all[0:B * T]                       # (B*T, D) context tokens
    svc = emb_all[B * T:B * T + 4 * B]           # (4B, D)  services [int|req|cxt|val]
    itm = emb_all[B * T + 4 * B:N_IDX]           # (4B, D)  items    [int|req|cxt|val]

    # --- encoder: per-token projection, pool ENCODED states, then project ---
    seq = jnp.tanh(jnp.dot(ctx, w_ref[OFF_ENC_SEQ:OFF_ENC_SEQ + D, 0:H],
                           preferred_element_type=f32)
                   + bias(BR_ENC_SEQ, H))                            # (B*T, H)
    # mean-pool over the encoder outputs (aligned sublane reductions, no
    # runtime pooling matrix)
    pooled = jnp.concatenate(
        [jnp.mean(seq[b * T:(b + 1) * T], axis=0, keepdims=True) for b in range(B)],
        axis=0)                                                      # (B, H)
    hid = jnp.tanh(jnp.dot(pooled, w_ref[OFF_ENC_HID:OFF_ENC_HID + H, 0:H],
                           preferred_element_type=f32)
                   + bias(BR_ENC_HID, H))                            # (B, H)

    # --- Loader: all 4 schema (service, item) pairs in one matmul -----------
    sch_in = jnp.concatenate([svc, itm], axis=1)                     # (4B, 2D)
    sch_all = jnp.tanh(jnp.dot(sch_in, w_ref[OFF_SCH:OFF_SCH + 2 * D, 0:H],
                               preferred_element_type=f32)
                       + bias(BR_SCH, H))                            # (4B, H)
    sch_int = sch_all[0 * B:1 * B]      # active intent
    sch_req = sch_all[1 * B:2 * B]      # requested slots
    sch_cxt = sch_all[2 * B:3 * B]      # context gate
    sch_val = sch_all[3 * B:4 * B]      # slot-filling value (decoder)

    # --- Heads (act cls / req cls / gate) fused into one lane-dense block ---
    sch_cat = jnp.concatenate([sch_int, sch_req, sch_cxt], axis=1)   # (B, 3H)
    h_all = jnp.tanh(
        jnp.dot(hid, w_ref[OFF_W1H:OFF_W1H + H, 0:3 * H],
                preferred_element_type=f32)
        + jnp.dot(sch_cat, w_ref[OFF_W1S:OFF_W1S + 3 * H, 0:3 * H],
                  preferred_element_type=f32)
        + bias(BR_HEAD1, 3 * H))                                     # (B, 3H)
    head = (jnp.dot(h_all, w_ref[OFF_W2:OFF_W2 + 3 * H, :],
                    preferred_element_type=f32)
            + bias(BR_HEAD2, LANES))                                 # (B, 128)

    # --- Decoder: recurrence kept; vocab projection hoisted to ONE matmul ---
    dec_in = jnp.concatenate([hid, sch_val], axis=1)                 # (B, 2H)
    s = jnp.tanh(jnp.dot(dec_in, w_ref[OFF_DEC_I:OFF_DEC_I + 2 * H, 0:H],
                         preferred_element_type=f32)
                 + bias(BR_DEC_I, H))                                # (B, H)
    w_ss = w_ref[OFF_DEC_SS:OFF_DEC_SS + H, 0:H]
    for t in range(max_len):                                         # static unroll
        s = jnp.tanh(jnp.dot(s, w_ss, preferred_element_type=f32))
        st_ref[t * B:(t + 1) * B, :] = s                             # VMEM scratch
    dec = jnp.dot(st_ref[...], w_ref[OFF_DEC_SV:OFF_DEC_SV + H, :],
                  preferred_element_type=f32)                        # (max_len*B, 128)
    # TODO(synk): copy/pointer mechanism over ext_z / ext_i / unk_v / cat_f
    #             is not implemented (see module header).

    # --- single lane-dense output slab: [dec rows | head rows | zero pad] ---
    dec_rows = max_len * B
    out_ref[0:dec_rows, :] = dec
    out_ref[dec_rows:dec_rows + 8, :] = jnp.concatenate(
        [head, jnp.zeros((8 - B, LANES), f32)], axis=0)


# ---------------------------------------------------------------------------
# parameter init (deterministic) and slab packing
# ---------------------------------------------------------------------------
def init_params(key):
    ks = jax.random.split(key, 24)
    n = lambda i, shape: (jax.random.normal(ks[i], shape, jnp.float32)
                          * (1.0 / jnp.sqrt(shape[0])))
    return {
        "emb_table": jax.random.normal(ks[0], (V, D), jnp.float32) * 0.1,
        # Encoder
        "enc_w_seq": n(1, (D, H)), "enc_b_seq": jnp.zeros((1, H), jnp.float32),
        "enc_w_hid": n(2, (H, H)), "enc_b_hid": jnp.zeros((1, H), jnp.float32),
        # Loader (schema)
        "sch_w_a": n(3, (D, H)), "sch_w_b": n(4, (D, H)),
        "sch_b": jnp.zeros((1, H), jnp.float32),
        # act classifier
        "act_w1h": n(5, (H, H)), "act_w1s": n(6, (H, H)),
        "act_b1": jnp.zeros((1, H), jnp.float32),
        "act_w2": n(7, (H, 1)), "act_b2": jnp.zeros((1, 1), jnp.float32),
        # req classifier
        "req_w1h": n(8, (H, H)), "req_w1s": n(9, (H, H)),
        "req_b1": jnp.zeros((1, H), jnp.float32),
        "req_w2": n(10, (H, 1)), "req_b2": jnp.zeros((1, 1), jnp.float32),
        # gate
        "gat_w1h": n(11, (H, H)), "gat_w1s": n(12, (H, H)),
        "gat_b1": jnp.zeros((1, H), jnp.float32),
        "gat_w2": n(13, (H, N_GATE)), "gat_b2": jnp.zeros((1, N_GATE), jnp.float32),
        # decoder
        "dec_w_ih": n(14, (H, H)), "dec_w_is": n(15, (H, H)),
        "dec_b_i": jnp.zeros((1, H), jnp.float32),
        "dec_w_ss": n(16, (H, H)), "dec_w_sv": n(17, (H, V)),
    }


def _block_diag(mats):
    rows = []
    for i, m in enumerate(mats):
        row = [m if j == i else jnp.zeros((m.shape[0], mj.shape[1]), m.dtype)
               for j, mj in enumerate(mats)]
        rows.append(jnp.concatenate(row, axis=1))
    return jnp.concatenate(rows, axis=0)


def prepare_params(p):
    """Pre-fuse all weights/biases + embedding table into ONE (552, 128) f32
    slab (single input DMA); done once, host-side."""
    def place(slab, row, m):
        return slab.at[row:row + m.shape[0], 0:m.shape[1]].set(m)

    w = jnp.zeros((W_ROWS, LANES), jnp.float32)
    w = place(w, OFF_EMB, p["emb_table"])
    w = place(w, OFF_ENC_SEQ, p["enc_w_seq"])
    w = place(w, OFF_ENC_HID, p["enc_w_hid"])
    w = place(w, OFF_SCH, jnp.concatenate([p["sch_w_a"], p["sch_w_b"]], axis=0))
    w = place(w, OFF_W1H, jnp.concatenate(
        [p["act_w1h"], p["req_w1h"], p["gat_w1h"]], axis=1))
    w = place(w, OFF_W1S, _block_diag([p["act_w1s"], p["req_w1s"], p["gat_w1s"]]))
    w = place(w, OFF_W2, _block_diag([p["act_w2"], p["req_w2"], p["gat_w2"]]))
    w = place(w, OFF_DEC_I, jnp.concatenate([p["dec_w_ih"], p["dec_w_is"]], axis=0))
    w = place(w, OFF_DEC_SS, p["dec_w_ss"])
    w = place(w, OFF_DEC_SV, p["dec_w_sv"])
    # biases (one row each, lane-padded with zeros)
    w = place(w, OFF_BIAS + BR_ENC_SEQ, p["enc_b_seq"])
    w = place(w, OFF_BIAS + BR_ENC_HID, p["enc_b_hid"])
    w = place(w, OFF_BIAS + BR_SCH, p["sch_b"])
    w = place(w, OFF_BIAS + BR_HEAD1, jnp.concatenate(
        [p["act_b1"], p["req_b1"], p["gat_b1"]], axis=1))
    w = place(w, OFF_BIAS + BR_HEAD2, jnp.concatenate(
        [p["act_b2"], p["req_b2"], p["gat_b2"]], axis=1))
    w = place(w, OFF_BIAS + BR_DEC_I, p["dec_b_i"])
    return w


# ---------------------------------------------------------------------------
# jitted driver: pack indices + ONE pallas_call + slice the output slab
# ---------------------------------------------------------------------------
@functools.partial(jax.jit, static_argnames=("max_len",))
def _forward_jit(w_slab, idx, max_len):
    idx_all = jnp.concatenate([
        idx["context"].reshape(-1).astype(jnp.int32),
        idx["svc_int"].astype(jnp.int32), idx["svc_req"].astype(jnp.int32),
        idx["svc_cxt"].astype(jnp.int32), idx["svc_val"].astype(jnp.int32),
        idx["itm_int"].astype(jnp.int32), idx["itm_req"].astype(jnp.int32),
        idx["itm_cxt"].astype(jnp.int32), idx["itm_val"].astype(jnp.int32),
    ]).reshape(N_IDX, 1)

    dec_rows = max_len * B
    out = pl.pallas_call(
        functools.partial(fused_forward_kernel, max_len=max_len),
        out_shape=jax.ShapeDtypeStruct((dec_rows + 8, LANES), jnp.float32),
        in_specs=[pl.BlockSpec(memory_space=pltpu.MemorySpace.VMEM),
                  pl.BlockSpec(memory_space=pltpu.MemorySpace.VMEM)],
        out_specs=pl.BlockSpec(memory_space=pltpu.MemorySpace.VMEM),
        scratch_shapes=[pltpu.VMEM((dec_rows, H), jnp.float32)],
    )(idx_all, w_slab)

    dec = out[0:dec_rows, 0:V].reshape(max_len, B, V).transpose(1, 0, 2)  # (B, L, V)
    head = out[dec_rows:dec_rows + B, :]                                  # (B, 128)
    act = head[:, 0:1]
    req = head[:, 1:2]
    gat = head[:, 2:2 + N_GATE]
    return act, req, dec, gat


def net_forward(w_slab, batch):
    # max_len must be a static Python int (baked into the unrolled decoder).
    max_len = int(batch["slot_filling"]["max_len"])
    idx = dict(
        context=batch["context"],
        svc_int=batch["active_intent"]["service_idx"],
        itm_int=batch["active_intent"]["intent_idx"],
        svc_req=batch["requested_slots"]["service_idx"],
        itm_req=batch["requested_slots"]["slot_idx"],
        svc_val=batch["slot_filling"]["value_service_idx"],
        itm_val=batch["slot_filling"]["value_slot_idx"],
        svc_cxt=batch["slot_filling"]["context_service_idx"],
        itm_cxt=batch["slot_filling"]["context_slot_idx"],
    )
    act, req, dec, gat = _forward_jit(w_slab, idx, max_len)
    # mimic the per-example list outputs of the PyTorch forward
    # (unbundled OUTSIDE the jit/device boundary).
    act_o = [act[b] for b in range(B)]
    req_o = [req[b] for b in range(B)]
    dec_o = [dec[b] for b in range(B)]
    cxt_o = [gat[b] for b in range(B)]
    return act_o, req_o, dec_o, cxt_o


if __name__ == "__main__":
    key = jax.random.PRNGKey(0)
    pkey, dkey = jax.random.split(key)
    params = init_params(pkey)
    w_slab = prepare_params(params)

    ks = jax.random.split(dkey, 8)
    batch = {
        "context": jax.random.randint(ks[0], (B, T), 0, V),
        "active_intent": {
            "service_idx": jax.random.randint(ks[1], (B,), 0, V),
            "intent_idx": jax.random.randint(ks[2], (B,), 0, V),
        },
        "requested_slots": {
            "service_idx": jax.random.randint(ks[3], (B,), 0, V),
            "slot_idx": jax.random.randint(ks[4], (B,), 0, V),
        },
        "slot_filling": {
            "max_len": MAX_LEN,
            "value_service_idx": jax.random.randint(ks[5], (B,), 0, V),
            "value_slot_idx": jax.random.randint(ks[6], (B,), 0, V),
            "context_service_idx": jax.random.randint(ks[7], (B,), 0, V),
            "context_slot_idx": jax.random.randint(ks[0], (B,), 0, V),
        },
        # ext_list / ext_context / value_idx / is_categorical feed the copy
        # mechanism, which is not implemented (see TODO(synk) in the kernel).
    }

    out = net_forward(w_slab, batch)
    out = jax.block_until_ready(out)
    (act_o, req_o, dec_o, cxt_o) = out
    assert act_o[0].shape == (1,)
    assert req_o[0].shape == (1,)
    assert dec_o[0].shape == (MAX_LEN, V)
    assert cxt_o[0].shape == (N_GATE,)
    print("KERNEL_OK")
</pallas_src>

<mosaic_0001>
module attributes {stable_mosaic.version = 11 : i64} {
  func.func @fused_forward_kernel(%arg0: memref<32x1xi32, #tpu.memory_space<vmem>>, %arg1: memref<552x128xf32, #tpu.memory_space<vmem>>, %arg2: memref<16x128xf32, #tpu.memory_space<vmem>>, %arg3: memref<8x32xf32, #tpu.memory_space<vmem>>) attributes {dimension_semantics = [], scalar_prefetch = 0 : i64, scratch_operands = 1 : i64, tpu.core_type = #tpu.core_type<tc>} {
    %c0 = arith.constant 0 : index
    %c0_0 = arith.constant 0 : index
    %0 = vector.load %arg0[%c0, %c0_0] : memref<32x1xi32, #tpu.memory_space<vmem>>, vector<32x1xi32>
    %1 = tpu.iota {dimensions = array<i32: 1>} : vector<32x64xi32>
    %2 = vector.broadcast %0 : vector<32x1xi32> to vector<32x64xi32>
    %3 = arith.cmpi eq, %2, %1 : vector<32x64xi32>
    %4 = arith.extui %3 : vector<32x64xi1> to vector<32x64xi32>
    %5 = arith.sitofp %4 : vector<32x64xi32> to vector<32x64xf32>
    %c0_1 = arith.constant 0 : index
    %c0_2 = arith.constant 0 : index
    %6 = vector.load %arg1[%c0_1, %c0_2] : memref<552x128xf32, #tpu.memory_space<vmem>>, vector<64x32xf32>
    %cst = arith.constant dense<0.000000e+00> : vector<32x32xf32>
    %7 = tpu.matmul %5, %6, %cst {dimension_numbers = #tpu.dot_dimension_numbers<[1], [0], [0], [1], [0, 0, 1, 1], [], []>} : vector<32x64xf32>, vector<64x32xf32>, vector<32x32xf32> -> vector<32x32xf32>
    %8 = vector.extract_strided_slice %7 {offsets = [0, 0], sizes = [16, 32], strides = [1, 1]} : vector<32x32xf32> to vector<16x32xf32>
    %9 = vector.extract_strided_slice %7 {offsets = [16, 0], sizes = [8, 32], strides = [1, 1]} : vector<32x32xf32> to vector<8x32xf32>
    %10 = vector.extract_strided_slice %7 {offsets = [24, 0], sizes = [8, 32], strides = [1, 1]} : vector<32x32xf32> to vector<8x32xf32>
    %c64 = arith.constant 64 : index
    %c0_3 = arith.constant 0 : index
    %11 = vector.load %arg1[%c64, %c0_3] : memref<552x128xf32, #tpu.memory_space<vmem>>, vector<32x32xf32>
    %cst_4 = arith.constant dense<0.000000e+00> : vector<16x32xf32>
    %12 = tpu.matmul %8, %11, %cst_4 {dimension_numbers = #tpu.dot_dimension_numbers<[1], [0], [0], [1], [0, 0, 1, 1], [], []>} : vector<16x32xf32>, vector<32x32xf32>, vector<16x32xf32> -> vector<16x32xf32>
    %c544 = arith.constant 544 : index
    %c0_5 = arith.constant 0 : index
    %13 = vector.load %arg1[%c544, %c0_5] : memref<552x128xf32, #tpu.memory_space<vmem>>, vector<1x32xf32>
    %14 = vector.broadcast %13 : vector<1x32xf32> to vector<16x32xf32>
    %15 = arith.addf %12, %14 : vector<16x32xf32>
    %16 = math.tanh %15 : vector<16x32xf32>
    %17 = vector.extract_strided_slice %16 {offsets = [0, 0], sizes = [8, 32], strides = [1, 1]} : vector<16x32xf32> to vector<8x32xf32>
    %cst_6 = arith.constant dense<0.000000e+00> : vector<32xf32>
    %18 = vector.multi_reduction <add>, %17, %cst_6 [0] : vector<8x32xf32> to vector<32xf32>
    %19 = vector.shape_cast %18 : vector<32xf32> to vector<1x32xf32>
    %cst_7 = arith.constant 8.000000e+00 : f32
    %20 = vector.broadcast %cst_7 : f32 to vector<1x32xf32>
    %21 = arith.divf %19, %20 : vector<1x32xf32>
    %22 = vector.extract_strided_slice %16 {offsets = [8, 0], sizes = [8, 32], strides = [1, 1]} : vector<16x32xf32> to vector<8x32xf32>
    %cst_8 = arith.constant dense<0.000000e+00> : vector<32xf32>
    %23 = vector.multi_reduction <add>, %22, %cst_8 [0] : vector<8x32xf32> to vector<32xf32>
    %24 = vector.shape_cast %23 : vector<32xf32> to vector<1x32xf32>
    %cst_9 = arith.constant 8.000000e+00 : f32
    %25 = vector.broadcast %cst_9 : f32 to vector<1x32xf32>
    %26 = arith.divf %24, %25 : vector<1x32xf32>
    %27 = tpu.concatenate %21, %26 in 0 : vector<1x32xf32>, vector<1x32xf32> -> vector<2x32xf32>
    %c96 = arith.constant 96 : index
    %c0_10 = arith.constant 0 : index
    %28 = vector.load %arg1[%c96, %c0_10] : memref<552x128xf32, #tpu.memory_space<vmem>>, vector<32x32xf32>
    %cst_11 = arith.constant dense<0.000000e+00> : vector<2x32xf32>
    %29 = tpu.matmul %27, %28, %cst_11 {dimension_numbers = #tpu.dot_dimension_numbers<[1], [0], [0], [1], [0, 0, 1, 1], [], []>} : vector<2x32xf32>, vector<32x32xf32>, vector<2x32xf32> -> vector<2x32xf32>
    %c545 = arith.constant 545 : index
    %c0_12 = arith.constant 0 : index
    %30 = vector.load %arg1[%c545, %c0_12] : memref<552x128xf32, #tpu.memory_space<vmem>>, vector<1x32xf32>
    %31 = vector.broadcast %30 : vector<1x32xf32> to vector<2x32xf32>
    %32 = arith.addf %29, %31 : vector<2x32xf32>
    %33 = math.tanh %32 : vector<2x32xf32>
    %34 = tpu.concatenate %9, %10 in 1 : vector<8x32xf32>, vector<8x32xf32> -> vector<8x64xf32>
    %c128 = arith.constant 128 : index
    %c0_13 = arith.constant 0 : index
    %35 = vector.load %arg1[%c128, %c0_13] : memref<552x128xf32, #tpu.memory_space<vmem>>, vector<64x32xf32>
    %cst_14 = arith.constant dense<0.000000e+00> : vector<8x32xf32>
    %36 = tpu.matmul %34, %35, %cst_14 {dimension_numbers = #tpu.dot_dimension_numbers<[1], [0], [0], [1], [0, 0, 1, 1], [], []>} : vector<8x64xf32>, vector<64x32xf32>, vector<8x32xf32> -> vector<8x32xf32>
    %c546 = arith.constant 546 : index
    %c0_15 = arith.constant 0 : index
    %37 = vector.load %arg1[%c546, %c0_15] : memref<552x128xf32, #tpu.memory_space<vmem>>, vector<1x32xf32>
    %38 = vector.broadcast %37 : vector<1x32xf32> to vector<8x32xf32>
    %39 = arith.addf %36, %38 : vector<8x32xf32>
    %40 = math.tanh %39 : vector<8x32xf32>
    %41 = vector.extract_strided_slice %40 {offsets = [0, 0], sizes = [2, 32], strides = [1, 1]} : vector<8x32xf32> to vector<2x32xf32>
    %42 = vector.extract_strided_slice %40 {offsets = [2, 0], sizes = [2, 32], strides = [1, 1]} : vector<8x32xf32> to vector<2x32xf32>
    %43 = vector.extract_strided_slice %40 {offsets = [4, 0], sizes = [2, 32], strides = [1, 1]} : vector<8x32xf32> to vector<2x32xf32>
    %44 = vector.extract_strided_slice %40 {offsets = [6, 0], sizes = [2, 32], strides = [1, 1]} : vector<8x32xf32> to vector<2x32xf32>
    %45 = tpu.concatenate %41, %42, %43 in 1 : vector<2x32xf32>, vector<2x32xf32>, vector<2x32xf32> -> vector<2x96xf32>
    %c192 = arith.constant 192 : index
    %c0_16 = arith.constant 0 : index
    %46 = vector.load %arg1[%c192, %c0_16] : memref<552x128xf32, #tpu.memory_space<vmem>>, vector<32x96xf32>
    %cst_17 = arith.constant dense<0.000000e+00> : vector<2x96xf32>
    %47 = tpu.matmul %33, %46, %cst_17 {dimension_numbers = #tpu.dot_dimension_numbers<[1], [0], [0], [1], [0, 0, 1, 1], [], []>} : vector<2x32xf32>, vector<32x96xf32>, vector<2x96xf32> -> vector<2x96xf32>
    %c224 = arith.constant 224 : index
    %c0_18 = arith.constant 0 : index
    %48 = vector.load %arg1[%c224, %c0_18] : memref<552x128xf32, #tpu.memory_space<vmem>>, vector<96x96xf32>
    %cst_19 = arith.constant dense<0.000000e+00> : vector<2x96xf32>
    %49 = tpu.matmul %45, %48, %cst_19 {dimension_numbers = #tpu.dot_dimension_numbers<[1], [0], [0], [1], [0, 0, 1, 1], [], []>} : vector<2x96xf32>, vector<96x96xf32>, vector<2x96xf32> -> vector<2x96xf32>
    %50 = arith.addf %47, %49 : vector<2x96xf32>
    %c547 = arith.constant 547 : index
    %c0_20 = arith.constant 0 : index
    %51 = vector.load %arg1[%c547, %c0_20] : memref<552x128xf32, #tpu.memory_space<vmem>>, vector<1x96xf32>
    %52 = vector.broadcast %51 : vector<1x96xf32> to vector<2x96xf32>
    %53 = arith.addf %50, %52 : vector<2x96xf32>
    %54 = math.tanh %53 : vector<2x96xf32>
    %c320 = arith.constant 320 : index
    %c0_21 = arith.constant 0 : index
    %55 = vector.load %arg1[%c320, %c0_21] : memref<552x128xf32, #tpu.memory_space<vmem>>, vector<96x128xf32>
    %cst_22 = arith.constant dense<0.000000e+00> : vector<2x128xf32>
    %56 = tpu.matmul %54, %55, %cst_22 {dimension_numbers = #tpu.dot_dimension_numbers<[1], [0], [0], [1], [0, 0, 1, 1], [], []>} : vector<2x96xf32>, vector<96x128xf32>, vector<2x128xf32> -> vector<2x128xf32>
    %c548 = arith.constant 548 : index
    %c0_23 = arith.constant 0 : index
    %57 = vector.load %arg1[%c548, %c0_23] : memref<552x128xf32, #tpu.memory_space<vmem>>, vector<1x128xf32>
    %58 = vector.broadcast %57 : vector<1x128xf32> to vector<2x128xf32>
    %59 = arith.addf %56, %58 : vector<2x128xf32>
    %60 = tpu.concatenate %33, %44 in 1 : vector<2x32xf32>, vector<2x32xf32> -> vector<2x64xf32>
    %c416 = arith.constant 416 : index
    %c0_24 = arith.constant 0 : index
    %61 = vector.load %arg1[%c416, %c0_24] : memref<552x128xf32, #tpu.memory_space<vmem>>, vector<64x32xf32>
    %cst_25 = arith.constant dense<0.000000e+00> : vector<2x32xf32>
    %62 = tpu.matmul %60, %61, %cst_25 {dimension_numbers = #tpu.dot_dimension_numbers<[1], [0], [0], [1], [0, 0, 1, 1], [], []>} : vector<2x64xf32>, vector<64x32xf32>, vector<2x32xf32> -> vector<2x32xf32>
    %c549 = arith.constant 549 : index
    %c0_26 = arith.constant 0 : index
    %63 = vector.load %arg1[%c549, %c0_26] : memref<552x128xf32, #tpu.memory_space<vmem>>, vector<1x32xf32>
    %64 = vector.broadcast %63 : vector<1x32xf32> to vector<2x32xf32>
    %65 = arith.addf %62, %64 : vector<2x32xf32>
    %66 = math.tanh %65 : vector<2x32xf32>
    %c480 = arith.constant 480 : index
    %c0_27 = arith.constant 0 : index
    %67 = vector.load %arg1[%c480, %c0_27] : memref<552x128xf32, #tpu.memory_space<vmem>>, vector<32x32xf32>
    %cst_28 = arith.constant dense<0.000000e+00> : vector<2x32xf32>
    %68 = tpu.matmul %66, %67, %cst_28 {dimension_numbers = #tpu.dot_dimension_numbers<[1], [0], [0], [1], [0, 0, 1, 1], [], []>} : vector<2x32xf32>, vector<32x32xf32>, vector<2x32xf32> -> vector<2x32xf32>
    %69 = math.tanh %68 : vector<2x32xf32>
    %c0_29 = arith.constant 0 : index
    %c0_30 = arith.constant 0 : index
    %70 = vector.load %arg3[%c0_29, %c0_30] : memref<8x32xf32, #tpu.memory_space<vmem>>, vector<2x32xf32>
    tpu.vector_store %arg3[%c0_29, %c0_30], %69 {strides = array<i32>} : memref<8x32xf32, #tpu.memory_space<vmem>>, vector<2x32xf32>,
    %cst_31 = arith.constant dense<0.000000e+00> : vector<2x32xf32>
    %71 = tpu.matmul %69, %67, %cst_31 {dimension_numbers = #tpu.dot_dimension_numbers<[1], [0], [0], [1], [0, 0, 1, 1], [], []>} : vector<2x32xf32>, vector<32x32xf32>, vector<2x32xf32> -> vector<2x32xf32>
    %72 = math.tanh %71 : vector<2x32xf32>
    %c2 = arith.constant 2 : index
    %c0_32 = arith.constant 0 : index
    %73 = vector.load %arg3[%c2, %c0_32] : memref<8x32xf32, #tpu.memory_space<vmem>>, vector<2x32xf32>
    tpu.vector_store %arg3[%c2, %c0_32], %72 {strides = array<i32>} : memref<8x32xf32, #tpu.memory_space<vmem>>, vector<2x32xf32>,
    %cst_33 = arith.constant dense<0.000000e+00> : vector<2x32xf32>
    %74 = tpu.matmul %72, %67, %cst_33 {dimension_numbers = #tpu.dot_dimension_numbers<[1], [0], [0], [1], [0, 0, 1, 1], [], []>} : vector<2x32xf32>, vector<32x32xf32>, vector<2x32xf32> -> vector<2x32xf32>
    %75 = math.tanh %74 : vector<2x32xf32>
    %c4 = arith.constant 4 : index
    %c0_34 = arith.constant 0 : index
    %76 = vector.load %arg3[%c4, %c0_34] : memref<8x32xf32, #tpu.memory_space<vmem>>, vector<2x32xf32>
    tpu.vector_store %arg3[%c4, %c0_34], %75 {strides = array<i32>} : memref<8x32xf32, #tpu.memory_space<vmem>>, vector<2x32xf32>,
    %cst_35 = arith.constant dense<0.000000e+00> : vector<2x32xf32>
    %77 = tpu.matmul %75, %67, %cst_35 {dimension_numbers = #tpu.dot_dimension_numbers<[1], [0], [0], [1], [0, 0, 1, 1], [], []>} : vector<2x32xf32>, vector<32x32xf32>, vector<2x32xf32> -> vector<2x32xf32>
    %78 = math.tanh %77 : vector<2x32xf32>
    %c6 = arith.constant 6 : index
    %c0_36 = arith.constant 0 : index
    %79 = vector.load %arg3[%c6, %c0_36] : memref<8x32xf32, #tpu.memory_space<vmem>>, vector<2x32xf32>
    tpu.vector_store %arg3[%c6, %c0_36], %78 {strides = array<i32>} : memref<8x32xf32, #tpu.memory_space<vmem>>, vector<2x32xf32>,
    %c0_37 = arith.constant 0 : index
    %c0_38 = arith.constant 0 : index
    %80 = vector.load %arg3[%c0_37, %c0_38] : memref<8x32xf32, #tpu.memory_space<vmem>>, vector<8x32xf32>
    %c512 = arith.constant 512 : index
    %c0_39 = arith.constant 0 : index
    %81 = vector.load %arg1[%c512, %c0_39] : memref<552x128xf32, #tpu.memory_space<vmem>>, vector<32x128xf32>
    %cst_40 = arith.constant dense<0.000000e+00> : vector<8x128xf32>
    %82 = tpu.matmul %80, %81, %cst_40 {dimension_numbers = #tpu.dot_dimension_numbers<[1], [0], [0], [1], [0, 0, 1, 1], [], []>} : vector<8x32xf32>, vector<32x128xf32>, vector<8x128xf32> -> vector<8x128xf32>
    %c0_41 = arith.constant 0 : index
    %c0_42 = arith.constant 0 : index
    %83 = vector.load %arg2[%c0_41, %c0_42] : memref<16x128xf32, #tpu.memory_space<vmem>>, vector<8x128xf32>
    tpu.vector_store %arg2[%c0_41, %c0_42], %82 {strides = array<i32>} : memref<16x128xf32, #tpu.memory_space<vmem>>, vector<8x128xf32>,
    %cst_43 = arith.constant 0.000000e+00 : f32
    %84 = vector.broadcast %cst_43 : f32 to vector<6x128xf32>
    %85 = tpu.concatenate %59, %84 in 0 : vector<2x128xf32>, vector<6x128xf32> -> vector<8x128xf32>
    %c8 = arith.constant 8 : index
    %c0_44 = arith.constant 0 : index
    %86 = vector.load %arg2[%c8, %c0_44] : memref<16x128xf32, #tpu.memory_space<vmem>>, vector<8x128xf32>
    tpu.vector_store %arg2[%c8, %c0_44], %85 {strides = array<i32>} : memref<16x128xf32, #tpu.memory_space<vmem>>, vector<8x128xf32>,
    return
  }
}

</mosaic_0001>

<llo_original>
// kernel: _forward_jit.1
$region0: #{_forward_jit.1}
  #allocation0 [shape = 'u32[]', space=smem, size = 0x4, offset = 0x4, fixed_abs, tag = 'smem constant byte address 0x4 - core index']
  #allocation1 [shape = 'u32[144,128]{1,0:T(1,128)}', space=vmem, size = 0x12000, scoped, tag = 'internal scratch']
  #allocation2 [shape = 'f32[8,32]{1,0:T(8,128)}', space=vmem, size = 0x1000, scoped, tag = 'scratch operand']
  %s0 = inlined_call_operand.vmem [shape: s32[32,1], index: 0, kind: input, shape index: {}]
  %s1 = inlined_call_operand.hbm [shape: f32[552,128], index: 1, kind: input, shape index: {}]
  %s2 = inlined_call_operand.vmem [shape: f32[16,128], index: 2, kind: output, shape index: {}]
  %s3 = sld [smem:[#allocation0]]
  $region22: #{_forward_jit.1} parent=0
    _
  %s5 = ssub.s32 1, %s3
  %s6 = scalar_select 0, %s5, %s3
  $region1: #{_forward_jit.1} parent=0
    #allocation3 [shape = 'u8[282624]{0}', space=vmem, size = 0x45000, scoped, tag = 'input window, operand 1, single buffered']
    #allocation4 [shape = 's32[1]{0}', space=sflag, size = 0x4, scoped, tag = 'scoped memory for _forward_jit.1']
    %7 = vsyncpa [#allocation4], 0
    // Predicated region
    $region2: #{_forward_jit.1} parent=1 // pred_check
      _
    $region3: #{_forward_jit.1} parent=1 // pred_check_branch
      %9 = sbr.rel (0) target = $region5
    $region4: #{_forward_jit.1} parent=1 // pred_region
      _
    $region5: #{_forward_jit.1} parent=1 // pred_fallthru
      _
    // Predicated region
    $region6: #{_forward_jit.1} parent=1 // pred_check
      _
    $region7: #{_forward_jit.1} parent=1 // pred_check_branch
      %11 = sbr.rel (0) target = $region9
    $region8: #{_forward_jit.1} parent=1 // pred_region
      %s13 = ssub.s32 8832, 8832
      %14 = vsyncadd [#allocation4], %s13
      %s15 = sshll.u32 [#allocation3], 4
      %s16 = int_to_ptr.vmem [resolvable:$true] %s15
      %21 = dma.hbm_to_vmem [thread:$0]  %s1, 8832, %s16, [#allocation4], 128, 128, 8
    $region9: #{_forward_jit.1} parent=1 // pred_fallthru
      _
    // Predicated region
    $region10: #{_forward_jit.1} parent=1 // pred_check
      _
    $region11: #{_forward_jit.1} parent=1 // pred_check_branch
      %23 = sbr.rel (0) target = $region13
    $region12: #{_forward_jit.1} parent=1 // pred_region
      %24 = dma.done [#allocation4], 8832
    $region13: #{_forward_jit.1} parent=1 // pred_fallthru
      _
    %v25 = vld [vmem:[%s0] sm:$0xff]
    %v26 = vld [vmem:[%s0 + $0x8] sm:$0xff]
    %v27 = vld [vmem:[%s0 + $0x10] sm:$0xff]
    %v28 = vld [vmem:[%s0 + $0x18] sm:$0xff]
    %v29 = vlaneseq
    %v30 = vand.u32 %v29, 127
    %31 = vset.pattern.permute.xlu0 0
    %32 = vperm.xlu0 %31, %v25
    %v33 = vpop.permute.xlu0 %32
    %34 = vset.pattern.permute.xlu0 0
    %35 = vperm.xlu0 %34, %v26
    %v36 = vpop.permute.xlu0 %35
    %37 = vset.pattern.permute.xlu0 0
    %38 = vperm.xlu0 %37, %v27
    %v39 = vpop.permute.xlu0 %38
    %40 = vset.pattern.permute.xlu0 0
    %41 = vperm.xlu0 %40, %v28
    %v42 = vpop.permute.xlu0 %41
    %vm43 = vcmp.eq.s32.totalorder %v33, %v30
    %vm44 = vcmp.eq.s32.totalorder %v36, %v30
    %vm45 = vcmp.eq.s32.totalorder %v39, %v30
    %vm46 = vcmp.eq.s32.totalorder %v42, %v30
    %v47 = vsel %vm43, 1, 0
    %v48 = vsel %vm44, 1, 0
    %v49 = vsel %vm45, 1, 0
    %v50 = vsel %vm46, 1, 0
    %v51 = vcvt.s32.f32 %v47
    %v52 = vcvt.s32.f32 %v48
    %v53 = vcvt.s32.f32 %v49
    %v54 = vcvt.s32.f32 %v50
    %v55 = vld [vmem:[#allocation3] sm:$0xff]
    %v56 = vld [vmem:[#allocation3 + $0x8] sm:$0xff]
    %v57 = vld [vmem:[#allocation3 + $0x10] sm:$0xff]
    %v58 = vld [vmem:[#allocation3 + $0x18] sm:$0xff]
    %v59 = vld [vmem:[#allocation3 + $0x20] sm:$0xff]
    %v60 = vld [vmem:[#allocation3 + $0x28] sm:$0xff]
    %v61 = vld [vmem:[#allocation3 + $0x30] sm:$0xff]
    %v62 = vld [vmem:[#allocation3 + $0x38] sm:$0xff]
    %vm63 = vcmask 523264
    %v65 = vsel %vm63, %v51, 0
    %v68 = vsel %vm63, %v52, 0
    %v71 = vsel %vm63, %v53, 0
    %v74 = vsel %vm63, %v54, 0
    %76 = vmatprep.subr.mxu0 0.0
    %77 = vmatpush1.msra.mxu0 %v55
    %78 = vmatprep.subr.mxu0 0.0
    %79 = vmatpush1.msra.mxu0 %v56
    %80 = vmatprep.subr.mxu0 0.0
    %81 = vmatpush1.msra.mxu0 %v57
    %82 = vmatprep.subr.mxu0 0.0
    %83 = vmatpush1.msra.mxu0 %v58
    %84 = vmatprep.subr.mxu0 0.0
    %85 = vmatpush1.msra.mxu0 %v59
    %86 = vmatprep.subr.mxu0 0.0
    %87 = vmatpush1.msra.mxu0 %v60
    %88 = vmatprep.subr.mxu0 0.0
    %89 = vmatpush1.msra.mxu0 %v61
    %90 = vmatprep.subr.mxu0 0.0
    %91 = vmatpush1.msra.mxu0 %v62
    %92 = vmatprep.subr.mxu0 0.0
    %93 = vmatpush1.msra.mxu0 0.0
    %94 = vmatprep.subr.mxu0 0.0
    %95 = vmatpush1.msra.mxu0 0.0
    %96 = vmatprep.subr.mxu0 0.0
    %97 = vmatpush1.msra.mxu0 0.0
    %98 = vmatprep.subr.mxu0 0.0
    %99 = vmatpush1.msra.mxu0 0.0
    %100 = vmatprep.subr.mxu0 0.0
    %101 = vmatpush1.msra.mxu0 0.0
    %102 = vmatprep.subr.mxu0 0.0
    %103 = vmatpush1.msra.mxu0 0.0
    %104 = vmatprep.subr.mxu0 0.0
    %105 = vmatpush1.msra.mxu0 0.0
    %106 = vmatprep.subr.mxu0 0.0
    %107 = vmatpush1.msra.mxu0 0.0
    %108 = vmatprep.subr.mxu0 0.0
    %109 = vmatpush1.msra.mxu0 0.0
    %110 = vmatprep.subr.mxu0 0.0
    %111 = vmatpush1.msra.mxu0 0.0
    %112 = vmatprep.subr.mxu0 0.0
    %113 = vmatpush1.msra.mxu0 0.0
    %114 = vmatprep.subr.mxu0 0.0
    %115 = vmatpush1.msra.mxu0 0.0
    %116 = vmatprep.subr.mxu0 0.0
    %117 = vmatpush1.msra.mxu0 0.0
    %118 = vmatprep.subr.mxu0 0.0
    %119 = vmatpush1.msra.mxu0 0.0
    %120 = vmatprep.subr.mxu0 0.0
    %121 = vmatpush1.msra.mxu0 0.0
    %122 = vmatprep.subr.mxu0 0.0
    %123 = vmatpush1.msra.mxu0 0.0
    %124 = vmatprep.subr.mxu0 0.0
    %125 = vmatpush1.msra.mxu0 0.0
    %126 = vmatprep.subr.mxu0 0.0
    %127 = vmatpush1.msra.mxu0 0.0
    %128 = vmatprep.subr.mxu0 0.0
    %129 = vmatpush1.msra.mxu0 0.0
    %130 = vmatprep.subr.mxu0 0.0
    %131 = vmatpush1.msra.mxu0 0.0
    %132 = vmatprep.subr.mxu0 0.0
    %133 = vmatpush1.msra.mxu0 0.0
    %134 = vmatprep.subr.mxu0 0.0
    %135 = vmatpush1.msra.mxu0 0.0
    %136 = vmatprep.subr.mxu0 0.0
    %137 = vmatpush1.msra.mxu0 0.0
    %138 = vmatprep.subr.mxu0 0.0
    %139 = vmatpush1.msra.mxu0 0.0
    %140 = vmatprep.mubr.f32.mxu0 0.0
    %141 = vmatmul.mubr.f32.gmra.mrb[0].mxu0 %v65
    %v142 = vpop.f32.mrb[0].mxu0
    %v143 = vadd.f32 0.0, %v142
    %v144 = vpop.f32.mrb[0].mxu0
    %145 = vmatprep.mubr.f32.mxu0 0.0
    %146 = vmatmul.mubr.f32.gmra.mrb[0].mxu0 %v68
    %v147 = vpop.f32.mrb[0].mxu0
    %v148 = vadd.f32 0.0, %v147
    %v149 = vpop.f32.mrb[0].mxu0
    %150 = vmatprep.mubr.f32.mxu0 0.0
    %151 = vmatmul.mubr.f32.gmra.mrb[0].mxu0 %v71
    %v152 = vpop.f32.mrb[0].mxu0
    %v153 = vadd.f32 0.0, %v152
    %v154 = vpop.f32.mrb[0].mxu0
    %155 = vmatprep.mubr.f32.mxu0 0.0
    %156 = vmatmul.mubr.f32.gmra.mrb[0].mxu0 %v74
    %v157 = vpop.f32.mrb[0].mxu0
    %v158 = vadd.f32 0.0, %v157
    %v159 = vpop.f32.mrb[0].mxu0
    %160 = vdwg.mxu0
    %v161 = vld [vmem:[#allocation3 + $0x40] sm:$0xff]
    %v162 = vld [vmem:[#allocation3 + $0x48] sm:$0xff]
    %v163 = vld [vmem:[#allocation3 + $0x50] sm:$0xff]
    %v164 = vld [vmem:[#allocation3 + $0x58] sm:$0xff]
    %v165 = vld [vmem:[#allocation3 + $0x220] sm:$0x1]
    %v166 = vlaneseq
    %v167 = vshrl.u32 %v166, 7
    %v168 = vsub.s32 0, %v167
    %v169 = vrot.slane %v165, %v168
    %vm170 = vcmask 261120
    %v172 = vsel %vm170, %v143, 0
    %v175 = vsel %vm170, %v148, 0
    %177 = vmatprep.subr.mxu0 0.0
    %178 = vmatpush1.msra.mxu0 %v161
    %179 = vmatprep.subr.mxu0 0.0
    %180 = vmatpush1.msra.mxu0 %v162
    %181 = vmatprep.subr.mxu0 0.0
    %182 = vmatpush1.msra.mxu0 %v163
    %183 = vmatprep.subr.mxu0 0.0
    %184 = vmatpush1.msra.mxu0 %v164
    %185 = vmatprep.subr.mxu0 0.0
    %186 = vmatpush1.msra.mxu0 0.0
    %187 = vmatprep.subr.mxu0 0.0
    %188 = vmatpush1.msra.mxu0 0.0
    %189 = vmatprep.subr.mxu0 0.0
    %190 = vmatpush1.msra.mxu0 0.0
    %191 = vmatprep.subr.mxu0 0.0
    %192 = vmatpush1.msra.mxu0 0.0
    %193 = vmatprep.subr.mxu0 0.0
    %194 = vmatpush1.msra.mxu0 0.0
    %195 = vmatprep.subr.mxu0 0.0
    %196 = vmatpush1.msra.mxu0 0.0
    %197 = vmatprep.subr.mxu0 0.0
    %198 = vmatpush1.msra.mxu0 0.0
    %199 = vmatprep.subr.mxu0 0.0
    %200 = vmatpush1.msra.mxu0 0.0
    %201 = vmatprep.subr.mxu0 0.0
    %202 = vmatpush1.msra.mxu0 0.0
    %203 = vmatprep.subr.mxu0 0.0
    %204 = vmatpush1.msra.mxu0 0.0
    %205 = vmatprep.subr.mxu0 0.0
    %206 = vmatpush1.msra.mxu0 0.0
    %207 = vmatprep.subr.mxu0 0.0
    %208 = vmatpush1.msra.mxu0 0.0
    %209 = vmatprep.subr.mxu0 0.0
    %210 = vmatpush1.msra.mxu0 0.0
    %211 = vmatprep.subr.mxu0 0.0
    %212 = vmatpush1.msra.mxu0 0.0
    %213 = vmatprep.subr.mxu0 0.0
    %214 = vmatpush1.msra.mxu0 0.0
    %215 = vmatprep.subr.mxu0 0.0
    %216 = vmatpush1.msra.mxu0 0.0
    %217 = vmatprep.subr.mxu0 0.0
    %218 = vmatpush1.msra.mxu0 0.0
    %219 = vmatprep.subr.mxu0 0.0
    %220 = vmatpush1.msra.mxu0 0.0
    %221 = vmatprep.subr.mxu0 0.0
    %222 = vmatpush1.msra.mxu0 0.0
    %223 = vmatprep.subr.mxu0 0.0
    %224 = vmatpush1.msra.mxu0 0.0
    %225 = vmatprep.subr.mxu0 0.0
    %226 = vmatpush1.msra.mxu0 0.0
    %227 = vmatprep.subr.mxu0 0.0
    %228 = vmatpush1.msra.mxu0 0.0
    %229 = vmatprep.subr.mxu0 0.0
    %230 = vmatpush1.msra.mxu0 0.0
    %231 = vmatprep.subr.mxu0 0.0
    %232 = vmatpush1.msra.mxu0 0.0
    %233 = vmatprep.subr.mxu0 0.0
    %234 = vmatpush1.msra.mxu0 0.0
    %235 = vmatprep.subr.mxu0 0.0
    %236 = vmatpush1.msra.mxu0 0.0
    %237 = vmatprep.subr.mxu0 0.0
    %238 = vmatpush1.msra.mxu0 0.0
    %239 = vmatprep.subr.mxu0 0.0
    %240 = vmatpush1.msra.mxu0 0.0
    %241 = vmatprep.mubr.f32.mxu0 0.0
    %242 = vmatmul.mubr.f32.gmra.mrb[0].mxu0 %v172
    %v243 = vpop.f32.mrb[0].mxu0
    %v244 = vadd.f32 %v169, %v243
    %v245 = vpop.f32.mrb[0].mxu0
    %246 = vmatprep.mubr.f32.mxu0 0.0
    %247 = vmatmul.mubr.f32.gmra.mrb[0].mxu0 %v175
    %v248 = vpop.f32.mrb[0].mxu0
    %v249 = vadd.f32 %v169, %v248
    %v250 = vpop.f32.mrb[0].mxu0
    %251 = vdwg.mxu0
    %v252 = vtanh.pop %v244
    %v253 = vtanh.pop %v249
    %v254 = vsel %vm170, %v252, 0.0
    %v255 = vrot.slane %v254, 4
    %v256 = vadd.f32 %v254, %v255
    %v257 = vrot.slane %v256, 2
    %v258 = vadd.f32 %v256, %v257
    %v259 = vrot.slane %v258, 1
    %v260 = vadd.f32 %v258, %v259
    %v261 = vrcp.pop 8.0
    %v262 = vmul.f32 %v260, %v261
    %v263 = vsel %vm170, %v253, 0.0
    %v264 = vrot.slane %v263, 4
    %v265 = vadd.f32 %v263, %v264
    %v266 = vrot.slane %v265, 2
    %v267 = vadd.f32 %v265, %v266
    %v268 = vrot.slane %v267, 1
    %v269 = vadd.f32 %v267, %v268
    %v270 = vmul.f32 %v269, %v261
    %vm271 = vcmask 1040384
    %v272 = vsel %vm271, %v262, %v270
    %v273 = vld [vmem:[#allocation3 + $0x60] sm:$0xff]
    %v274 = vld [vmem:[#allocation3 + $0x68] sm:$0xff]
    %v275 = vld [vmem:[#allocation3 + $0x70] sm:$0xff]
    %v276 = vld [vmem:[#allocation3 + $0x78] sm:$0xff]
    %v277 = vld [vmem:[#allocation3 + $0x221] sm:$0x1]
    %v278 = vlaneseq
    %v279 = vshrl.u32 %v278, 7
    %v280 = vsub.s32 0, %v279
    %v281 = vrot.slane %v277, %v280
    %v283 = vsel %vm170, %v272, 0
    %285 = vmatprep.subr.mxu0 0.0
    %286 = vmatpush1.msra.mxu0 %v273
    %287 = vmatprep.subr.mxu0 0.0
    %288 = vmatpush1.msra.mxu0 %v274
    %289 = vmatprep.subr.mxu0 0.0
    %290 = vmatpush1.msra.mxu0 %v275
    %291 = vmatprep.subr.mxu0 0.0
    %292 = vmatpush1.msra.mxu0 %v276
    %293 = vmatprep.subr.mxu0 0.0
    %294 = vmatpush1.msra.mxu0 0.0
    %295 = vmatprep.subr.mxu0 0.0
    %296 = vmatpush1.msra.mxu0 0.0
    %297 = vmatprep.subr.mxu0 0.0
    %298 = vmatpush1.msra.mxu0 0.0
    %299 = vmatprep.subr.mxu0 0.0
    %300 = vmatpush1.msra.mxu0 0.0
    %301 = vmatprep.subr.mxu0 0.0
    %302 = vmatpush1.msra.mxu0 0.0
    %303 = vmatprep.subr.mxu0 0.0
    %304 = vmatpush1.msra.mxu0 0.0
    %305 = vmatprep.subr.mxu0 0.0
    %306 = vmatpush1.msra.mxu0 0.0
    %307 = vmatprep.subr.mxu0 0.0
    %308 = vmatpush1.msra.mxu0 0.0
    %309 = vmatprep.subr.mxu0 0.0
    %310 = vmatpush1.msra.mxu0 0.0
    %311 = vmatprep.subr.mxu0 0.0
    %312 = vmatpush1.msra.mxu0 0.0
    %313 = vmatprep.subr.mxu0 0.0
    %314 = vmatpush1.msra.mxu0 0.0
    %315 = vmatprep.subr.mxu0 0.0
    %316 = vmatpush1.msra.mxu0 0.0
    %317 = vmatprep.subr.mxu0 0.0
    %318 = vmatpush1.msra.mxu0 0.0
    %319 = vmatprep.subr.mxu0 0.0
    %320 = vmatpush1.msra.mxu0 0.0
    %321 = vmatprep.subr.mxu0 0.0
    %322 = vmatpush1.msra.mxu0 0.0
    %323 = vmatprep.subr.mxu0 0.0
    %324 = vmatpush1.msra.mxu0 0.0
    %325 = vmatprep.subr.mxu0 0.0
    %326 = vmatpush1.msra.mxu0 0.0
    %327 = vmatprep.subr.mxu0 0.0
    %328 = vmatpush1.msra.mxu0 0.0
    %329 = vmatprep.subr.mxu0 0.0
    %330 = vmatpush1.msra.mxu0 0.0
    %331 = vmatprep.subr.mxu0 0.0
    %332 = vmatpush1.msra.mxu0 0.0
    %333 = vmatprep.subr.mxu0 0.0
    %334 = vmatpush1.msra.mxu0 0.0
    %335 = vmatprep.subr.mxu0 0.0
    %336 = vmatpush1.msra.mxu0 0.0
    %337 = vmatprep.subr.mxu0 0.0
    %338 = vmatpush1.msra.mxu0 0.0
    %339 = vmatprep.subr.mxu0 0.0
    %340 = vmatpush1.msra.mxu0 0.0
    %341 = vmatprep.subr.mxu0 0.0
    %342 = vmatpush1.msra.mxu0 0.0
    %343 = vmatprep.subr.mxu0 0.0
    %344 = vmatpush1.msra.mxu0 0.0
    %345 = vmatprep.subr.mxu0 0.0
    %346 = vmatpush1.msra.mxu0 0.0
    %347 = vmatprep.subr.mxu0 0.0
    %348 = vmatpush1.msra.mxu0 0.0
    %349 = vmatprep.mubr.f32.mxu0 0.0
    %350 = vmatmul.mubr.f32.gmra.mrb[0].mxu0 %v283
    %v351 = vpop.f32.mrb[0].mxu0
    %v352 = vadd.f32 %v281, %v351
    %v353 = vpop.f32.mrb[0].mxu0
    %354 = vdwg.mxu0
    %v355 = vtanh.pop %v352
    %357 = vrot.lane.b32.xlu0 %v158, 32
    %v358 = vpop.permute.xlu0 %357
    %v360 = vsel %vm170, %v153, %v358
    %v361 = vld [vmem:[#allocation3 + $0x80] sm:$0xff]
    %v362 = vld [vmem:[#allocation3 + $0x88] sm:$0xff]
    %v363 = vld [vmem:[#allocation3 + $0x90] sm:$0xff]
    %v364 = vld [vmem:[#allocation3 + $0x98] sm:$0xff]
    %v365 = vld [vmem:[#allocation3 + $0xa0] sm:$0xff]
    %v366 = vld [vmem:[#allocation3 + $0xa8] sm:$0xff]
    %v367 = vld [vmem:[#allocation3 + $0xb0] sm:$0xff]
    %v368 = vld [vmem:[#allocation3 + $0xb8] sm:$0xff]
    %v369 = vld [vmem:[#allocation3 + $0x222] sm:$0x1]
    %v370 = vlaneseq
    %v371 = vshrl.u32 %v370, 7
    %v372 = vsub.s32 0, %v371
    %v373 = vrot.slane %v369, %v372
    %v375 = vsel %vm63, %v360, 0
    %377 = vmatprep.subr.mxu0 0.0
    %378 = vmatpush1.msra.mxu0 %v361
    %379 = vmatprep.subr.mxu0 0.0
    %380 = vmatpush1.msra.mxu0 %v362
    %381 = vmatprep.subr.mxu0 0.0
    %382 = vmatpush1.msra.mxu0 %v363
    %383 = vmatprep.subr.mxu0 0.0
    %384 = vmatpush1.msra.mxu0 %v364
    %385 = vmatprep.subr.mxu0 0.0
    %386 = vmatpush1.msra.mxu0 %v365
    %387 = vmatprep.subr.mxu0 0.0
    %388 = vmatpush1.msra.mxu0 %v366
    %389 = vmatprep.subr.mxu0 0.0
    %390 = vmatpush1.msra.mxu0 %v367
    %391 = vmatprep.subr.mxu0 0.0
    %392 = vmatpush1.msra.mxu0 %v368
    %393 = vmatprep.subr.mxu0 0.0
    %394 = vmatpush1.msra.mxu0 0.0
    %395 = vmatprep.subr.mxu0 0.0
    %396 = vmatpush1.msra.mxu0 0.0
    %397 = vmatprep.subr.mxu0 0.0
    %398 = vmatpush1.msra.mxu0 0.0
    %399 = vmatprep.subr.mxu0 0.0
    %400 = vmatpush1.msra.mxu0 0.0
    %401 = vmatprep.subr.mxu0 0.0
    %402 = vmatpush1.msra.mxu0 0.0
    %403 = vmatprep.subr.mxu0 0.0
    %404 = vmatpush1.msra.mxu0 0.0
    %405 = vmatprep.subr.mxu0 0.0
    %406 = vmatpush1.msra.mxu0 0.0
    %407 = vmatprep.subr.mxu0 0.0
    %408 = vmatpush1.msra.mxu0 0.0
    %409 = vmatprep.subr.mxu0 0.0
    %410 = vmatpush1.msra.mxu0 0.0
    %411 = vmatprep.subr.mxu0 0.0
    %412 = vmatpush1.msra.mxu0 0.0
    %413 = vmatprep.subr.mxu0 0.0
    %414 = vmatpush1.msra.mxu0 0.0
    %415 = vmatprep.subr.mxu0 0.0
    %416 = vmatpush1.msra.mxu0 0.0
    %417 = vmatprep.subr.mxu0 0.0
    %418 = vmatpush1.msra.mxu0 0.0
    %419 = vmatprep.subr.mxu0 0.0
    %420 = vmatpush1.msra.mxu0 0.0
    %421 = vmatprep.subr.mxu0 0.0
    %422 = vmatpush1.msra.mxu0 0.0
    %423 = vmatprep.subr.mxu0 0.0
    %424 = vmatpush1.msra.mxu0 0.0
    %425 = vmatprep.subr.mxu0 0.0
    %426 = vmatpush1.msra.mxu0 0.0
    %427 = vmatprep.subr.mxu0 0.0
    %428 = vmatpush1.msra.mxu0 0.0
    %429 = vmatprep.subr.mxu0 0.0
    %430 = vmatpush1.msra.mxu0 0.0
    %431 = vmatprep.subr.mxu0 0.0
    %432 = vmatpush1.msra.mxu0 0.0
    %433 = vmatprep.subr.mxu0 0.0
    %434 = vmatpush1.msra.mxu0 0.0
    %435 = vmatprep.subr.mxu0 0.0
    %436 = vmatpush1.msra.mxu0 0.0
    %437 = vmatprep.subr.mxu0 0.0
    %438 = vmatpush1.msra.mxu0 0.0
    %439 = vmatprep.subr.mxu0 0.0
    %440 = vmatpush1.msra.mxu0 0.0
    %441 = vmatprep.mubr.f32.mxu0 0.0
    %442 = vmatmul.mubr.f32.gmra.mrb[0].mxu0 %v375
    %v443 = vpop.f32.mrb[0].mxu0
    %v444 = vadd.f32 %v373, %v443
    %v445 = vpop.f32.mrb[0].mxu0
    %446 = vdwg.mxu0
    %v447 = vtanh.pop %v444
    %v449 = vrot.slane %v447, 2
    %450 = vrot.lane.b32.xlu0 %v449, 32
    %v451 = vpop.permute.xlu0 %450
    %v453 = vrot.slane %v447, 4
    %454 = vrot.lane.b32.xlu0 %v453, 64
    %v455 = vpop.permute.xlu0 %454
    %v457 = vsel %vm170, %v447, %v451
    %v458 = vsel %vm63, %v457, %v455
    %v459 = vld [vmem:[#allocation3 + $0xc0] sm:$0xff]
    %v460 = vld [vmem:[#allocation3 + $0xc8] sm:$0xff]
    %v461 = vld [vmem:[#allocation3 + $0xd0] sm:$0xff]
    %v462 = vld [vmem:[#allocation3 + $0xd8] sm:$0xff]
    %v463 = vld [vmem:[#allocation3 + $0xe0] sm:$0xff]
    %v464 = vld [vmem:[#allocation3 + $0xe8] sm:$0xff]
    %v465 = vld [vmem:[#allocation3 + $0xf0] sm:$0xff]
    %v466 = vld [vmem:[#allocation3 + $0xf8] sm:$0xff]
    %v467 = vld [vmem:[#allocation3 + $0x100] sm:$0xff]
    %v468 = vld [vmem:[#allocation3 + $0x108] sm:$0xff]
    %v469 = vld [vmem:[#allocation3 + $0x110] sm:$0xff]
    %v470 = vld [vmem:[#allocation3 + $0x118] sm:$0xff]
    %v471 = vld [vmem:[#allocation3 + $0x120] sm:$0xff]
    %v472 = vld [vmem:[#allocation3 + $0x128] sm:$0xff]
    %v473 = vld [vmem:[#allocation3 + $0x130] sm:$0xff]
    %v474 = vld [vmem:[#allocation3 + $0x138] sm:$0xff]
    %vm475 = vcmask 785408
    %v477 = vsel %vm475, %v458, 0
    %479 = vmatprep.subr.mxu0 0.0
    %480 = vmatpush1.msra.mxu0 %v463
    %481 = vmatprep.subr.mxu0 0.0
    %482 = vmatpush1.msra.mxu0 %v464
    %483 = vmatprep.subr.mxu0 0.0
    %484 = vmatpush1.msra.mxu0 %v465
    %485 = vmatprep.subr.mxu0 0.0
    %486 = vmatpush1.msra.mxu0 %v466
    %487 = vmatprep.subr.mxu0 0.0
    %488 = vmatpush1.msra.mxu0 %v467
    %489 = vmatprep.subr.mxu0 0.0
    %490 = vmatpush1.msra.mxu0 %v468
    %491 = vmatprep.subr.mxu0 0.0
    %492 = vmatpush1.msra.mxu0 %v469
    %493 = vmatprep.subr.mxu0 0.0
    %494 = vmatpush1.msra.mxu0 %v470
    %495 = vmatprep.subr.mxu0 0.0
    %496 = vmatpush1.msra.mxu0 %v471
    %497 = vmatprep.subr.mxu0 0.0
    %498 = vmatpush1.msra.mxu0 %v472
    %499 = vmatprep.subr.mxu0 0.0
    %500 = vmatpush1.msra.mxu0 %v473
    %501 = vmatprep.subr.mxu0 0.0
    %502 = vmatpush1.msra.mxu0 %v474
    %503 = vmatprep.subr.mxu0 0.0
    %504 = vmatpush1.msra.mxu0 0.0
    %505 = vmatprep.subr.mxu0 0.0
    %506 = vmatpush1.msra.mxu0 0.0
    %507 = vmatprep.subr.mxu0 0.0
    %508 = vmatpush1.msra.mxu0 0.0
    %509 = vmatprep.subr.mxu0 0.0
    %510 = vmatpush1.msra.mxu0 0.0
    %511 = vmatprep.subr.mxu0 0.0
    %512 = vmatpush1.msra.mxu0 0.0
    %513 = vmatprep.subr.mxu0 0.0
    %514 = vmatpush1.msra.mxu0 0.0
    %515 = vmatprep.subr.mxu0 0.0
    %516 = vmatpush1.msra.mxu0 0.0
    %517 = vmatprep.subr.mxu0 0.0
    %518 = vmatpush1.msra.mxu0 0.0
    %519 = vmatprep.subr.mxu0 0.0
    %520 = vmatpush1.msra.mxu0 0.0
    %521 = vmatprep.subr.mxu0 0.0
    %522 = vmatpush1.msra.mxu0 0.0
    %523 = vmatprep.subr.mxu0 0.0
    %524 = vmatpush1.msra.mxu0 0.0
    %525 = vmatprep.subr.mxu0 0.0
    %526 = vmatpush1.msra.mxu0 0.0
    %527 = vmatprep.subr.mxu0 0.0
    %528 = vmatpush1.msra.mxu0 0.0
    %529 = vmatprep.subr.mxu0 0.0
    %530 = vmatpush1.msra.mxu0 0.0
    %531 = vmatprep.subr.mxu0 0.0
    %532 = vmatpush1.msra.mxu0 0.0
    %533 = vmatprep.subr.mxu0 0.0
    %534 = vmatpush1.msra.mxu0 0.0
    %535 = vmatprep.subr.mxu0 0.0
    %536 = vmatpush1.msra.mxu0 0.0
    %537 = vmatprep.subr.mxu0 0.0
    %538 = vmatpush1.msra.mxu0 0.0
    %539 = vmatprep.subr.mxu0 0.0
    %540 = vmatpush1.msra.mxu0 0.0
    %541 = vmatprep.subr.mxu0 0.0
    %542 = vmatpush1.msra.mxu0 0.0
    %543 = vmatprep.mubr.f32.mxu0 0.0
    %544 = vmatmul.mubr.f32.gmra.mrb[0].mxu0 %v477
    %v545 = vpop.f32.mrb[0].mxu0
    %v546 = vadd.f32 0.0, %v545
    %v547 = vpop.f32.mrb[0].mxu0
    %548 = vdwg.mxu0
    %v550 = vsel %vm170, %v355, 0
    %552 = vmatprep.subr.mxu0 0.0
    %553 = vmatpush1.msra.mxu0 %v459
    %554 = vmatprep.subr.mxu0 0.0
    %555 = vmatpush1.msra.mxu0 %v460
    %556 = vmatprep.subr.mxu0 0.0
    %557 = vmatpush1.msra.mxu0 %v461
    %558 = vmatprep.subr.mxu0 0.0
    %559 = vmatpush1.msra.mxu0 %v462
    %560 = vmatprep.subr.mxu0 0.0
    %561 = vmatpush1.msra.mxu0 0.0
    %562 = vmatprep.subr.mxu0 0.0
    %563 = vmatpush1.msra.mxu0 0.0
    %564 = vmatprep.subr.mxu0 0.0
    %565 = vmatpush1.msra.mxu0 0.0
    %566 = vmatprep.subr.mxu0 0.0
    %567 = vmatpush1.msra.mxu0 0.0
    %568 = vmatprep.subr.mxu0 0.0
    %569 = vmatpush1.msra.mxu0 0.0
    %570 = vmatprep.subr.mxu0 0.0
    %571 = vmatpush1.msra.mxu0 0.0
    %572 = vmatprep.subr.mxu0 0.0
    %573 = vmatpush1.msra.mxu0 0.0
    %574 = vmatprep.subr.mxu0 0.0
    %575 = vmatpush1.msra.mxu0 0.0
    %576 = vmatprep.subr.mxu0 0.0
    %577 = vmatpush1.msra.mxu0 0.0
    %578 = vmatprep.subr.mxu0 0.0
    %579 = vmatpush1.msra.mxu0 0.0
    %580 = vmatprep.subr.mxu0 0.0
    %581 = vmatpush1.msra.mxu0 0.0
    %582 = vmatprep.subr.mxu0 0.0
    %583 = vmatpush1.msra.mxu0 0.0
    %584 = vmatprep.subr.mxu0 0.0
    %585 = vmatpush1.msra.mxu0 0.0
    %586 = vmatprep.subr.mxu0 0.0
    %587 = vmatpush1.msra.mxu0 0.0
    %588 = vmatprep.subr.mxu0 0.0
    %589 = vmatpush1.msra.mxu0 0.0
    %590 = vmatprep.subr.mxu0 0.0
    %591 = vmatpush1.msra.mxu0 0.0
    %592 = vmatprep.subr.mxu0 0.0
    %593 = vmatpush1.msra.mxu0 0.0
    %594 = vmatprep.subr.mxu0 0.0
    %595 = vmatpush1.msra.mxu0 0.0
    %596 = vmatprep.subr.mxu0 0.0
    %597 = vmatpush1.msra.mxu0 0.0
    %598 = vmatprep.subr.mxu0 0.0
    %599 = vmatpush1.msra.mxu0 0.0
    %600 = vmatprep.subr.mxu0 0.0
    %601 = vmatpush1.msra.mxu0 0.0
    %602 = vmatprep.subr.mxu0 0.0
    %603 = vmatpush1.msra.mxu0 0.0
    %604 = vmatprep.subr.mxu0 0.0
    %605 = vmatpush1.msra.mxu0 0.0
    %606 = vmatprep.subr.mxu0 0.0
    %607 = vmatpush1.msra.mxu0 0.0
    %608 = vmatprep.subr.mxu0 0.0
    %609 = vmatpush1.msra.mxu0 0.0
    %610 = vmatprep.subr.mxu0 0.0
    %611 = vmatpush1.msra.mxu0 0.0
    %612 = vmatprep.subr.mxu0 0.0
    %613 = vmatpush1.msra.mxu0 0.0
    %614 = vmatprep.subr.mxu0 0.0
    %615 = vmatpush1.msra.mxu0 0.0
    %616 = vmatprep.mubr.f32.mxu0 0.0
    %617 = vmatmul.mubr.f32.gmra.mrb[0].mxu0 %v550
    %v618 = vpop.f32.mrb[0].mxu0
    %v619 = vadd.f32 %v546, %v618
    %v620 = vpop.f32.mrb[0].mxu0
    %621 = vdwg.mxu0
    %v622 = vld [vmem:[#allocation3 + $0x223] sm:$0x1]
    %v623 = vlaneseq
    %v624 = vshrl.u32 %v623, 7
    %v625 = vsub.s32 0, %v624
    %v626 = vrot.slane %v622, %v625
    %v627 = vadd.f32 %v619, %v626
    %v628 = vtanh.pop %v627
    %v629 = vld [vmem:[#allocation3 + $0x140] sm:$0xff]
    %v630 = vld [vmem:[#allocation3 + $0x148] sm:$0xff]
    %v631 = vld [vmem:[#allocation3 + $0x150] sm:$0xff]
    %v632 = vld [vmem:[#allocation3 + $0x158] sm:$0xff]
    %v633 = vld [vmem:[#allocation3 + $0x160] sm:$0xff]
    %v634 = vld [vmem:[#allocation3 + $0x168] sm:$0xff]
    %v635 = vld [vmem:[#allocation3 + $0x170] sm:$0xff]
    %v636 = vld [vmem:[#allocation3 + $0x178] sm:$0xff]
    %v637 = vld [vmem:[#allocation3 + $0x180] sm:$0xff]
    %v638 = vld [vmem:[#allocation3 + $0x188] sm:$0xff]
    %v639 = vld [vmem:[#allocation3 + $0x190] sm:$0xff]
    %v640 = vld [vmem:[#allocation3 + $0x198] sm:$0xff]
    %v641 = vld [vmem:[#allocation3 + $0x224] sm:$0x1]
    %v642 = vlaneseq
    %v643 = vshrl.u32 %v642, 7
    %v644 = vsub.s32 0, %v643
    %v645 = vrot.slane %v641, %v644
    %v647 = vsel %vm475, %v628, 0
    %649 = vmatprep.subr.mxu0 0.0
    %650 = vmatpush1.msra.mxu0 %v629
    %651 = vmatprep.subr.mxu0 0.0
    %652 = vmatpush1.msra.mxu0 %v630
    %653 = vmatprep.subr.mxu0 0.0
    %654 = vmatpush1.msra.mxu0 %v631
    %655 = vmatprep.subr.mxu0 0.0
    %656 = vmatpush1.msra.mxu0 %v632
    %657 = vmatprep.subr.mxu0 0.0
    %658 = vmatpush1.msra.mxu0 %v633
    %659 = vmatprep.subr.mxu0 0.0
    %660 = vmatpush1.msra.mxu0 %v634
    %661 = vmatprep.subr.mxu0 0.0
    %662 = vmatpush1.msra.mxu0 %v635
    %663 = vmatprep.subr.mxu0 0.0
    %664 = vmatpush1.msra.mxu0 %v636
    %665 = vmatprep.subr.mxu0 0.0
    %666 = vmatpush1.msra.mxu0 %v637
    %667 = vmatprep.subr.mxu0 0.0
    %668 = vmatpush1.msra.mxu0 %v638
    %669 = vmatprep.subr.mxu0 0.0
    %670 = vmatpush1.msra.mxu0 %v639
    %671 = vmatprep.subr.mxu0 0.0
    %672 = vmatpush1.msra.mxu0 %v640
    %673 = vmatprep.subr.mxu0 0.0
    %674 = vmatpush1.msra.mxu0 0.0
    %675 = vmatprep.subr.mxu0 0.0
    %676 = vmatpush1.msra.mxu0 0.0
    %677 = vmatprep.subr.mxu0 0.0
    %678 = vmatpush1.msra.mxu0 0.0
    %679 = vmatprep.subr.mxu0 0.0
    %680 = vmatpush1.msra.mxu0 0.0
    %681 = vmatprep.subr.mxu0 0.0
    %682 = vmatpush1.msra.mxu0 0.0
    %683 = vmatprep.subr.mxu0 0.0
    %684 = vmatpush1.msra.mxu0 0.0
    %685 = vmatprep.subr.mxu0 0.0
    %686 = vmatpush1.msra.mxu0 0.0
    %687 = vmatprep.subr.mxu0 0.0
    %688 = vmatpush1.msra.mxu0 0.0
    %689 = vmatprep.subr.mxu0 0.0
    %690 = vmatpush1.msra.mxu0 0.0
    %691 = vmatprep.subr.mxu0 0.0
    %692 = vmatpush1.msra.mxu0 0.0
    %693 = vmatprep.subr.mxu0 0.0
    %694 = vmatpush1.msra.mxu0 0.0
    %695 = vmatprep.subr.mxu0 0.0
    %696 = vmatpush1.msra.mxu0 0.0
    %697 = vmatprep.subr.mxu0 0.0
    %698 = vmatpush1.msra.mxu0 0.0
    %699 = vmatprep.subr.mxu0 0.0
    %700 = vmatpush1.msra.mxu0 0.0
    %701 = vmatprep.subr.mxu0 0.0
    %702 = vmatpush1.msra.mxu0 0.0
    %703 = vmatprep.subr.mxu0 0.0
    %704 = vmatpush1.msra.mxu0 0.0
    %705 = vmatprep.subr.mxu0 0.0
    %706 = vmatpush1.msra.mxu0 0.0
    %707 = vmatprep.subr.mxu0 0.0
    %708 = vmatpush1.msra.mxu0 0.0
    %709 = vmatprep.subr.mxu0 0.0
    %710 = vmatpush1.msra.mxu0 0.0
    %711 = vmatprep.subr.mxu0 0.0
    %712 = vmatpush1.msra.mxu0 0.0
    %713 = vmatprep.mubr.f32.mxu0 0.0
    %714 = vmatmul.mubr.f32.gmra.mrb[0].mxu0 %v647
    %v715 = vpop.f32.mrb[0].mxu0
    %v716 = vadd.f32 %v645, %v715
    %v717 = vpop.f32.mrb[0].mxu0
    %718 = vdwg.mxu0
    %v719 = vrot.slane %v447, 6
    %720 = vrot.lane.b32.xlu0 %v719, 32
    %v721 = vpop.permute.xlu0 %720
    %v723 = vsel %vm170, %v355, %v721
    %v724 = vld [vmem:[#allocation3 + $0x1a0] sm:$0xff]
    %v725 = vld [vmem:[#allocation3 + $0x1a8] sm:$0xff]
    %v726 = vld [vmem:[#allocation3 + $0x1b0] sm:$0xff]
    %v727 = vld [vmem:[#allocation3 + $0x1b8] sm:$0xff]
    %v728 = vld [vmem:[#allocation3 + $0x1c0] sm:$0xff]
    %v729 = vld [vmem:[#allocation3 + $0x1c8] sm:$0xff]
    %v730 = vld [vmem:[#allocation3 + $0x1d0] sm:$0xff]
    %v731 = vld [vmem:[#allocation3 + $0x1d8] sm:$0xff]
    %v732 = vld [vmem:[#allocation3 + $0x225] sm:$0x1]
    %v733 = vlaneseq
    %v734 = vshrl.u32 %v733, 7
    %v735 = vsub.s32 0, %v734
    %v736 = vrot.slane %v732, %v735
    %v738 = vsel %vm63, %v723, 0
    %740 = vmatprep.subr.mxu0 0.0
    %741 = vmatpush1.msra.mxu0 %v724
    %742 = vmatprep.subr.mxu0 0.0
    %743 = vmatpush1.msra.mxu0 %v725
    %744 = vmatprep.subr.mxu0 0.0
    %745 = vmatpush1.msra.mxu0 %v726
    %746 = vmatprep.subr.mxu0 0.0
    %747 = vmatpush1.msra.mxu0 %v727
    %748 = vmatprep.subr.mxu0 0.0
    %749 = vmatpush1.msra.mxu0 %v728
    %750 = vmatprep.subr.mxu0 0.0
    %751 = vmatpush1.msra.mxu0 %v729
    %752 = vmatprep.subr.mxu0 0.0
    %753 = vmatpush1.msra.mxu0 %v730
    %754 = vmatprep.subr.mxu0 0.0
    %755 = vmatpush1.msra.mxu0 %v731
    %756 = vmatprep.subr.mxu0 0.0
    %757 = vmatpush1.msra.mxu0 0.0
    %758 = vmatprep.subr.mxu0 0.0
    %759 = vmatpush1.msra.mxu0 0.0
    %760 = vmatprep.subr.mxu0 0.0
    %761 = vmatpush1.msra.mxu0 0.0
    %762 = vmatprep.subr.mxu0 0.0
    %763 = vmatpush1.msra.mxu0 0.0
    %764 = vmatprep.subr.mxu0 0.0
    %765 = vmatpush1.msra.mxu0 0.0
    %766 = vmatprep.subr.mxu0 0.0
    %767 = vmatpush1.msra.mxu0 0.0
    %768 = vmatprep.subr.mxu0 0.0
    %769 = vmatpush1.msra.mxu0 0.0
    %770 = vmatprep.subr.mxu0 0.0
    %771 = vmatpush1.msra.mxu0 0.0
    %772 = vmatprep.subr.mxu0 0.0
    %773 = vmatpush1.msra.mxu0 0.0
    %774 = vmatprep.subr.mxu0 0.0
    %775 = vmatpush1.msra.mxu0 0.0
    %776 = vmatprep.subr.mxu0 0.0
    %777 = vmatpush1.msra.mxu0 0.0
    %778 = vmatprep.subr.mxu0 0.0
    %779 = vmatpush1.msra.mxu0 0.0
    %780 = vmatprep.subr.mxu0 0.0
    %781 = vmatpush1.msra.mxu0 0.0
    %782 = vmatprep.subr.mxu0 0.0
    %783 = vmatpush1.msra.mxu0 0.0
    %784 = vmatprep.subr.mxu0 0.0
    %785 = vmatpush1.msra.mxu0 0.0
    %786 = vmatprep.subr.mxu0 0.0
    %787 = vmatpush1.msra.mxu0 0.0
    %788 = vmatprep.subr.mxu0 0.0
    %789 = vmatpush1.msra.mxu0 0.0
    %790 = vmatprep.subr.mxu0 0.0
    %791 = vmatpush1.msra.mxu0 0.0
    %792 = vmatprep.subr.mxu0 0.0
    %793 = vmatpush1.msra.mxu0 0.0
    %794 = vmatprep.subr.mxu0 0.0
    %795 = vmatpush1.msra.mxu0 0.0
    %796 = vmatprep.subr.mxu0 0.0
    %797 = vmatpush1.msra.mxu0 0.0
    %798 = vmatprep.subr.mxu0 0.0
    %799 = vmatpush1.msra.mxu0 0.0
    %800 = vmatprep.subr.mxu0 0.0
    %801 = vmatpush1.msra.mxu0 0.0
    %802 = vmatprep.subr.mxu0 0.0
    %803 = vmatpush1.msra.mxu0 0.0
    %804 = vmatprep.mubr.f32.mxu0 0.0
    %805 = vmatmul.mubr.f32.gmra.mrb[0].mxu0 %v738
    %v806 = vpop.f32.mrb[0].mxu0
    %v807 = vadd.f32 %v736, %v806
    %v808 = vpop.f32.mrb[0].mxu0
    %809 = vdwg.mxu0
    %v810 = vtanh.pop %v807
    %v811 = vld [vmem:[#allocation3 + $0x1e0] sm:$0xff]
    %v812 = vld [vmem:[#allocation3 + $0x1e8] sm:$0xff]
    %v813 = vld [vmem:[#allocation3 + $0x1f0] sm:$0xff]
    %v814 = vld [vmem:[#allocation3 + $0x1f8] sm:$0xff]
    %v816 = vsel %vm170, %v810, 0
    %818 = vmatprep.subr.mxu0 0.0
    %819 = vmatpush1.msra.mxu0 %v811
    %820 = vmatprep.subr.mxu0 0.0
    %821 = vmatpush1.msra.mxu0 %v812
    %822 = vmatprep.subr.mxu0 0.0
    %823 = vmatpush1.msra.mxu0 %v813
    %824 = vmatprep.subr.mxu0 0.0
    %825 = vmatpush1.msra.mxu0 %v814
    %826 = vmatprep.subr.mxu0 0.0
    %827 = vmatpush1.msra.mxu0 0.0
    %828 = vmatprep.subr.mxu0 0.0
    %829 = vmatpush1.msra.mxu0 0.0
    %830 = vmatprep.subr.mxu0 0.0
    %831 = vmatpush1.msra.mxu0 0.0
    %832 = vmatprep.subr.mxu0 0.0
    %833 = vmatpush1.msra.mxu0 0.0
    %834 = vmatprep.subr.mxu0 0.0
    %835 = vmatpush1.msra.mxu0 0.0
    %836 = vmatprep.subr.mxu0 0.0
    %837 = vmatpush1.msra.mxu0 0.0
    %838 = vmatprep.subr.mxu0 0.0
    %839 = vmatpush1.msra.mxu0 0.0
    %840 = vmatprep.subr.mxu0 0.0
    %841 = vmatpush1.msra.mxu0 0.0
    %842 = vmatprep.subr.mxu0 0.0
    %843 = vmatpush1.msra.mxu0 0.0
    %844 = vmatprep.subr.mxu0 0.0
    %845 = vmatpush1.msra.mxu0 0.0
    %846 = vmatprep.subr.mxu0 0.0
    %847 = vmatpush1.msra.mxu0 0.0
    %848 = vmatprep.subr.mxu0 0.0
    %849 = vmatpush1.msra.mxu0 0.0
    %850 = vmatprep.subr.mxu0 0.0
    %851 = vmatpush1.msra.mxu0 0.0
    %852 = vmatprep.subr.mxu0 0.0
    %853 = vmatpush1.msra.mxu0 0.0
    %854 = vmatprep.subr.mxu0 0.0
    %855 = vmatpush1.msra.mxu0 0.0
    %856 = vmatprep.subr.mxu0 0.0
    %857 = vmatpush1.msra.mxu0 0.0
    %858 = vmatprep.subr.mxu0 0.0
    %859 = vmatpush1.msra.mxu0 0.0
    %860 = vmatprep.subr.mxu0 0.0
    %861 = vmatpush1.msra.mxu0 0.0
    %862 = vmatprep.subr.mxu0 0.0
    %863 = vmatpush1.msra.mxu0 0.0
    %864 = vmatprep.subr.mxu0 0.0
    %865 = vmatpush1.msra.mxu0 0.0
    %866 = vmatprep.subr.mxu0 0.0
    %867 = vmatpush1.msra.mxu0 0.0
    %868 = vmatprep.subr.mxu0 0.0
    %869 = vmatpush1.msra.mxu0 0.0
    %870 = vmatprep.subr.mxu0 0.0
    %871 = vmatpush1.msra.mxu0 0.0
    %872 = vmatprep.subr.mxu0 0.0
    %873 = vmatpush1.msra.mxu0 0.0
    %874 = vmatprep.subr.mxu0 0.0
    %875 = vmatpush1.msra.mxu0 0.0
    %876 = vmatprep.subr.mxu0 0.0
    %877 = vmatpush1.msra.mxu0 0.0
    %878 = vmatprep.subr.mxu0 0.0
    %879 = vmatpush1.msra.mxu0 0.0
    %880 = vmatprep.subr.mxu0 0.0
    %881 = vmatpush1.msra.mxu0 0.0
    %882 = vmatprep.mubr.f32.mxu0 0.0
    %883 = vmatmul.mubr.f32.gmra.mrb[0].mxu0 %v816
    %v884 = vpop.f32.mrb[0].mxu0
    %v885 = vadd.f32 0.0, %v884
    %v886 = vpop.f32.mrb[0].mxu0
    %887 = vdwg.mxu0
    %v888 = vtanh.pop %v885
    %vm889 = vcmask 254976
    %890 = vst.msk [vmem:[#allocation2] sm:$0x3] %vm889, %v888
    %v892 = vsel %vm170, %v888, 0
    %894 = vmatprep.subr.mxu0 0.0
    %895 = vmatpush1.msra.mxu0 %v811
    %896 = vmatprep.subr.mxu0 0.0
    %897 = vmatpush1.msra.mxu0 %v812
    %898 = vmatprep.subr.mxu0 0.0
    %899 = vmatpush1.msra.mxu0 %v813
    %900 = vmatprep.subr.mxu0 0.0
    %901 = vmatpush1.msra.mxu0 %v814
    %902 = vmatprep.subr.mxu0 0.0
    %903 = vmatpush1.msra.mxu0 0.0
    %904 = vmatprep.subr.mxu0 0.0
    %905 = vmatpush1.msra.mxu0 0.0
    %906 = vmatprep.subr.mxu0 0.0
    %907 = vmatpush1.msra.mxu0 0.0
    %908 = vmatprep.subr.mxu0 0.0
    %909 = vmatpush1.msra.mxu0 0.0
    %910 = vmatprep.subr.mxu0 0.0
    %911 = vmatpush1.msra.mxu0 0.0
    %912 = vmatprep.subr.mxu0 0.0
    %913 = vmatpush1.msra.mxu0 0.0
    %914 = vmatprep.subr.mxu0 0.0
    %915 = vmatpush1.msra.mxu0 0.0
    %916 = vmatprep.subr.mxu0 0.0
    %917 = vmatpush1.msra.mxu0 0.0
    %918 = vmatprep.subr.mxu0 0.0
    %919 = vmatpush1.msra.mxu0 0.0
    %920 = vmatprep.subr.mxu0 0.0
    %921 = vmatpush1.msra.mxu0 0.0
    %922 = vmatprep.subr.mxu0 0.0
    %923 = vmatpush1.msra.mxu0 0.0
    %924 = vmatprep.subr.mxu0 0.0
    %925 = vmatpush1.msra.mxu0 0.0
    %926 = vmatprep.subr.mxu0 0.0
    %927 = vmatpush1.msra.mxu0 0.0
    %928 = vmatprep.subr.mxu0 0.0
    %929 = vmatpush1.msra.mxu0 0.0
    %930 = vmatprep.subr.mxu0 0.0
    %931 = vmatpush1.msra.mxu0 0.0
    %932 = vmatprep.subr.mxu0 0.0
    %933 = vmatpush1.msra.mxu0 0.0
    %934 = vmatprep.subr.mxu0 0.0
    %935 = vmatpush1.msra.mxu0 0.0
    %936 = vmatprep.subr.mxu0 0.0
    %937 = vmatpush1.msra.mxu0 0.0
    %938 = vmatprep.subr.mxu0 0.0
    %939 = vmatpush1.msra.mxu0 0.0
    %940 = vmatprep.subr.mxu0 0.0
    %941 = vmatpush1.msra.mxu0 0.0
    %942 = vmatprep.subr.mxu0 0.0
    %943 = vmatpush1.msra.mxu0 0.0
    %944 = vmatprep.subr.mxu0 0.0
    %945 = vmatpush1.msra.mxu0 0.0
    %946 = vmatprep.subr.mxu0 0.0
    %947 = vmatpush1.msra.mxu0 0.0
    %948 = vmatprep.subr.mxu0 0.0
    %949 = vmatpush1.msra.mxu0 0.0
    %950 = vmatprep.subr.mxu0 0.0
    %951 = vmatpush1.msra.mxu0 0.0
    %952 = vmatprep.subr.mxu0 0.0
    %953 = vmatpush1.msra.mxu0 0.0
    %954 = vmatprep.subr.mxu0 0.0
    %955 = vmatpush1.msra.mxu0 0.0
    %956 = vmatprep.subr.mxu0 0.0
    %957 = vmatpush1.msra.mxu0 0.0
    %958 = vmatprep.mubr.f32.mxu0 0.0
    %959 = vmatmul.mubr.f32.gmra.mrb[0].mxu0 %v892
    %v960 = vpop.f32.mrb[0].mxu0
    %v961 = vadd.f32 0.0, %v960
    %v962 = vpop.f32.mrb[0].mxu0
    %963 = vdwg.mxu0
    %v964 = vtanh.pop %v961
    %965 = vst.msk [vmem:[#allocation2 + $0x2] sm:$0x3] %vm889, %v964
    %v967 = vsel %vm170, %v964, 0
    %969 = vmatprep.subr.mxu0 0.0
    %970 = vmatpush1.msra.mxu0 %v811
    %971 = vmatprep.subr.mxu0 0.0
    %972 = vmatpush1.msra.mxu0 %v812
    %973 = vmatprep.subr.mxu0 0.0
    %974 = vmatpush1.msra.mxu0 %v813
    %975 = vmatprep.subr.mxu0 0.0
    %976 = vmatpush1.msra.mxu0 %v814
    %977 = vmatprep.subr.mxu0 0.0
    %978 = vmatpush1.msra.mxu0 0.0
    %979 = vmatprep.subr.mxu0 0.0
    %980 = vmatpush1.msra.mxu0 0.0
    %981 = vmatprep.subr.mxu0 0.0
    %982 = vmatpush1.msra.mxu0 0.0
    %983 = vmatprep.subr.mxu0 0.0
    %984 = vmatpush1.msra.mxu0 0.0
    %985 = vmatprep.subr.mxu0 0.0
    %986 = vmatpush1.msra.mxu0 0.0
    %987 = vmatprep.subr.mxu0 0.0
    %988 = vmatpush1.msra.mxu0 0.0
    %989 = vmatprep.subr.mxu0 0.0
    %990 = vmatpush1.msra.mxu0 0.0
    %991 = vmatprep.subr.mxu0 0.0
    %992 = vmatpush1.msra.mxu0 0.0
    %993 = vmatprep.subr.mxu0 0.0
    %994 = vmatpush1.msra.mxu0 0.0
    %995 = vmatprep.subr.mxu0 0.0
    %996 = vmatpush1.msra.mxu0 0.0
    %997 = vmatprep.subr.mxu0 0.0
    %998 = vmatpush1.msra.mxu0 0.0
    %999 = vmatprep.subr.mxu0 0.0
    %1000 = vmatpush1.msra.mxu0 0.0
    %1001 = vmatprep.subr.mxu0 0.0
    %1002 = vmatpush1.msra.mxu0 0.0
    %1003 = vmatprep.subr.mxu0 0.0
    %1004 = vmatpush1.msra.mxu0 0.0
    %1005 = vmatprep.subr.mxu0 0.0
    %1006 = vmatpush1.msra.mxu0 0.0
    %1007 = vmatprep.subr.mxu0 0.0
    %1008 = vmatpush1.msra.mxu0 0.0
    %1009 = vmatprep.subr.mxu0 0.0
    %1010 = vmatpush1.msra.mxu0 0.0
    %1011 = vmatprep.subr.mxu0 0.0
    %1012 = vmatpush1.msra.mxu0 0.0
    %1013 = vmatprep.subr.mxu0 0.0
    %1014 = vmatpush1.msra.mxu0 0.0
    %1015 = vmatprep.subr.mxu0 0.0
    %1016 = vmatpush1.msra.mxu0 0.0
    %1017 = vmatprep.subr.mxu0 0.0
    %1018 = vmatpush1.msra.mxu0 0.0
    %1019 = vmatprep.subr.mxu0 0.0
    %1020 = vmatpush1.msra.mxu0 0.0
    %1021 = vmatprep.subr.mxu0 0.0
    %1022 = vmatpush1.msra.mxu0 0.0
    %1023 = vmatprep.subr.mxu0 0.0
    %1024 = vmatpush1.msra.mxu0 0.0
    %1025 = vmatprep.subr.mxu0 0.0
    %1026 = vmatpush1.msra.mxu0 0.0
    %1027 = vmatprep.subr.mxu0 0.0
    %1028 = vmatpush1.msra.mxu0 0.0
    %1029 = vmatprep.subr.mxu0 0.0
    %1030 = vmatpush1.msra.mxu0 0.0
    %1031 = vmatprep.subr.mxu0 0.0
    %1032 = vmatpush1.msra.mxu0 0.0
    %1033 = vmatprep.mubr.f32.mxu0 0.0
    %1034 = vmatmul.mubr.f32.gmra.mrb[0].mxu0 %v967
    %v1035 = vpop.f32.mrb[0].mxu0
    %v1036 = vadd.f32 0.0, %v1035
    %v1037 = vpop.f32.mrb[0].mxu0
    %1038 = vdwg.mxu0
    %v1039 = vtanh.pop %v1036
    %1040 = vst.msk [vmem:[#allocation2 + $0x4] sm:$0x3] %vm889, %v1039
    %v1042 = vsel %vm170, %v1039, 0
    %1044 = vmatprep.subr.mxu0 0.0
    %1045 = vmatpush1.msra.mxu0 %v811
    %1046 = vmatprep.subr.mxu0 0.0
    %1047 = vmatpush1.msra.mxu0 %v812
    %1048 = vmatprep.subr.mxu0 0.0
    %1049 = vmatpush1.msra.mxu0 %v813
    %1050 = vmatprep.subr.mxu0 0.0
    %1051 = vmatpush1.msra.mxu0 %v814
    %1052 = vmatprep.subr.mxu0 0.0
    %1053 = vmatpush1.msra.mxu0 0.0
    %1054 = vmatprep.subr.mxu0 0.0
    %1055 = vmatpush1.msra.mxu0 0.0
    %1056 = vmatprep.subr.mxu0 0.0
    %1057 = vmatpush1.msra.mxu0 0.0
    %1058 = vmatprep.subr.mxu0 0.0
    %1059 = vmatpush1.msra.mxu0 0.0
    %1060 = vmatprep.subr.mxu0 0.0
    %1061 = vmatpush1.msra.mxu0 0.0
    %1062 = vmatprep.subr.mxu0 0.0
    %1063 = vmatpush1.msra.mxu0 0.0
    %1064 = vmatprep.subr.mxu0 0.0
    %1065 = vmatpush1.msra.mxu0 0.0
    %1066 = vmatprep.subr.mxu0 0.0
    %1067 = vmatpush1.msra.mxu0 0.0
    %1068 = vmatprep.subr.mxu0 0.0
    %1069 = vmatpush1.msra.mxu0 0.0
    %1070 = vmatprep.subr.mxu0 0.0
    %1071 = vmatpush1.msra.mxu0 0.0
    %1072 = vmatprep.subr.mxu0 0.0
    %1073 = vmatpush1.msra.mxu0 0.0
    %1074 = vmatprep.subr.mxu0 0.0
    %1075 = vmatpush1.msra.mxu0 0.0
    %1076 = vmatprep.subr.mxu0 0.0
    %1077 = vmatpush1.msra.mxu0 0.0
    %1078 = vmatprep.subr.mxu0 0.0
    %1079 = vmatpush1.msra.mxu0 0.0
    %1080 = vmatprep.subr.mxu0 0.0
    %1081 = vmatpush1.msra.mxu0 0.0
    %1082 = vmatprep.subr.mxu0 0.0
    %1083 = vmatpush1.msra.mxu0 0.0
    %1084 = vmatprep.subr.mxu0 0.0
    %1085 = vmatpush1.msra.mxu0 0.0
    %1086 = vmatprep.subr.mxu0 0.0
    %1087 = vmatpush1.msra.mxu0 0.0
    %1088 = vmatprep.subr.mxu0 0.0
    %1089 = vmatpush1.msra.mxu0 0.0
    %1090 = vmatprep.subr.mxu0 0.0
    %1091 = vmatpush1.msra.mxu0 0.0
    %1092 = vmatprep.subr.mxu0 0.0
    %1093 = vmatpush1.msra.mxu0 0.0
    %1094 = vmatprep.subr.mxu0 0.0
    %1095 = vmatpush1.msra.mxu0 0.0
    %1096 = vmatprep.subr.mxu0 0.0
    %1097 = vmatpush1.msra.mxu0 0.0
    %1098 = vmatprep.subr.mxu0 0.0
    %1099 = vmatpush1.msra.mxu0 0.0
    %1100 = vmatprep.subr.mxu0 0.0
    %1101 = vmatpush1.msra.mxu0 0.0
    %1102 = vmatprep.subr.mxu0 0.0
    %1103 = vmatpush1.msra.mxu0 0.0
    %1104 = vmatprep.subr.mxu0 0.0
    %1105 = vmatpush1.msra.mxu0 0.0
    %1106 = vmatprep.subr.mxu0 0.0
    %1107 = vmatpush1.msra.mxu0 0.0
    %1108 = vmatprep.mubr.f32.mxu0 0.0
    %1109 = vmatmul.mubr.f32.gmra.mrb[0].mxu0 %v1042
    %v1110 = vpop.f32.mrb[0].mxu0
    %v1111 = vadd.f32 0.0, %v1110
    %v1112 = vpop.f32.mrb[0].mxu0
    %1113 = vdwg.mxu0
    %v1114 = vtanh.pop %v1111
    %1115 = vst.msk [vmem:[#allocation2 + $0x6] sm:$0x3] %vm889, %v1114
    %v1116 = vld [vmem:[#allocation2] sm:$0xff]
    %v1117 = vld [vmem:[#allocation3 + $0x200] sm:$0xff]
    %v1118 = vld [vmem:[#allocation3 + $0x208] sm:$0xff]
    %v1119 = vld [vmem:[#allocation3 + $0x210] sm:$0xff]
    %v1120 = vld [vmem:[#allocation3 + $0x218] sm:$0xff]
    %v1122 = vsel %vm170, %v1116, 0
    %1124 = vmatprep.subr.mxu0 0.0
    %1125 = vmatpush1.msra.mxu0 %v1117
    %1126 = vmatprep.subr.mxu0 0.0
    %1127 = vmatpush1.msra.mxu0 %v1118
    %1128 = vmatprep.subr.mxu0 0.0
    %1129 = vmatpush1.msra.mxu0 %v1119
    %1130 = vmatprep.subr.mxu0 0.0
    %1131 = vmatpush1.msra.mxu0 %v1120
    %1132 = vmatprep.subr.mxu0 0.0
    %1133 = vmatpush1.msra.mxu0 0.0
    %1134 = vmatprep.subr.mxu0 0.0
    %1135 = vmatpush1.msra.mxu0 0.0
    %1136 = vmatprep.subr.mxu0 0.0
    %1137 = vmatpush1.msra.mxu0 0.0
    %1138 = vmatprep.subr.mxu0 0.0
    %1139 = vmatpush1.msra.mxu0 0.0
    %1140 = vmatprep.subr.mxu0 0.0
    %1141 = vmatpush1.msra.mxu0 0.0
    %1142 = vmatprep.subr.mxu0 0.0
    %1143 = vmatpush1.msra.mxu0 0.0
    %1144 = vmatprep.subr.mxu0 0.0
    %1145 = vmatpush1.msra.mxu0 0.0
    %1146 = vmatprep.subr.mxu0 0.0
    %1147 = vmatpush1.msra.mxu0 0.0
    %1148 = vmatprep.subr.mxu0 0.0
    %1149 = vmatpush1.msra.mxu0 0.0
    %1150 = vmatprep.subr.mxu0 0.0
    %1151 = vmatpush1.msra.mxu0 0.0
    %1152 = vmatprep.subr.mxu0 0.0
    %1153 = vmatpush1.msra.mxu0 0.0
    %1154 = vmatprep.subr.mxu0 0.0
    %1155 = vmatpush1.msra.mxu0 0.0
    %1156 = vmatprep.subr.mxu0 0.0
    %1157 = vmatpush1.msra.mxu0 0.0
    %1158 = vmatprep.subr.mxu0 0.0
    %1159 = vmatpush1.msra.mxu0 0.0
    %1160 = vmatprep.subr.mxu0 0.0
    %1161 = vmatpush1.msra.mxu0 0.0
    %1162 = vmatprep.subr.mxu0 0.0
    %1163 = vmatpush1.msra.mxu0 0.0
    %1164 = vmatprep.subr.mxu0 0.0
    %1165 = vmatpush1.msra.mxu0 0.0
    %1166 = vmatprep.subr.mxu0 0.0
    %1167 = vmatpush1.msra.mxu0 0.0
    %1168 = vmatprep.subr.mxu0 0.0
    %1169 = vmatpush1.msra.mxu0 0.0
    %1170 = vmatprep.subr.mxu0 0.0
    %1171 = vmatpush1.msra.mxu0 0.0
    %1172 = vmatprep.subr.mxu0 0.0
    %1173 = vmatpush1.msra.mxu0 0.0
    %1174 = vmatprep.subr.mxu0 0.0
    %1175 = vmatpush1.msra.mxu0 0.0
    %1176 = vmatprep.subr.mxu0 0.0
    %1177 = vmatpush1.msra.mxu0 0.0
    %1178 = vmatprep.subr.mxu0 0.0
    %1179 = vmatpush1.msra.mxu0 0.0
    %1180 = vmatprep.subr.mxu0 0.0
    %1181 = vmatpush1.msra.mxu0 0.0
    %1182 = vmatprep.subr.mxu0 0.0
    %1183 = vmatpush1.msra.mxu0 0.0
    %1184 = vmatprep.subr.mxu0 0.0
    %1185 = vmatpush1.msra.mxu0 0.0
    %1186 = vmatprep.subr.mxu0 0.0
    %1187 = vmatpush1.msra.mxu0 0.0
    %1188 = vmatprep.mubr.f32.mxu0 0.0
    %1189 = vmatmul.mubr.f32.gmra.mrb[0].mxu0 %v1122
    %v1190 = vpop.f32.mrb[0].mxu0
    %v1191 = vadd.f32 0.0, %v1190
    %v1192 = vpop.f32.mrb[0].mxu0
    %1193 = vdwg.mxu0
    %1194 = vst [vmem:[%s2] sm:$0xff] %v1191
    %vm1195 = vcmask 1041408
    %v1196 = vsel %vm1195, %v716, 0.0
    %1197 = vst [vmem:[%s2 + $0x8] sm:$0xff] %v1196
    // Predicated region
    $region14: #{_forward_jit.1} parent=1 // pred_check
      _
    $region15: #{_forward_jit.1} parent=1 // pred_check_branch
      %1199 = sbr.rel (0) target = $region17
    $region16: #{_forward_jit.1} parent=1 // pred_region
      _
    $region17: #{_forward_jit.1} parent=1 // pred_fallthru
      _
    // Predicated region
    $region18: #{_forward_jit.1} parent=1 // pred_check
      _
    $region19: #{_forward_jit.1} parent=1 // pred_check_branch
      %1201 = sbr.rel (0) target = $region21
    $region20: #{_forward_jit.1} parent=1 // pred_region
      _
    $region21: #{_forward_jit.1} parent=1 // pred_fallthru
      _
    %1202 = vsyncpa [#allocation4], 1

</llo_original>
